<compile_context>
chip_gen: v5e
topology: v5e:2x2
jax: 0.10.0
libtpu: 0.0.40
codegen_flags: <defaults>
</compile_context>

<pallas_src>
import functools
import math

import jax
import jax.numpy as jnp
from jax.experimental import pallas as pl
from jax.experimental.pallas import tpu as pltpu


def _round_up(v, m):
    return (v + m - 1) // m * m


def _vmem_capacity_bytes():
    """Per-generation VMEM capacity; conservative 64 MiB (v7x) fallback."""
    try:
        info = pltpu.get_tpu_info()
        cap = getattr(info, "vmem_capacity_bytes", None)
        if cap:
            return int(cap)
    except Exception:
        pass
    return 64 * 1024 * 1024


def _layer_vmem_bytes(tm, tk, npad, fin, fout, out_itemsize, xn_resident):
    """Rough per-layer VMEM requirement (double-buffered BlockSpec operands)."""
    a = 2 * tm * tk * 1                                   # int8 adjacency tiles
    xn = 2 * (npad if xn_resident else tk) * fin * 2      # bf16 neighbor feats
    xs = 2 * tm * fin * 2                                  # bf16 self feats
    invd = 2 * tm * 4                                      # f32 1/deg
    w = 2 * (2 * fin) * fout * 2                           # bf16 stacked weight
    bias = 2 * max(fout, 128) * 4                          # f32 bias
    out = 2 * tm * fout * out_itemsize                     # output tiles
    acc = tm * fin * 4                                     # f32 accumulator
    return a + xn + xs + invd + w + bias + out + acc


def sage_layer_kernel(a_ref, invd_ref, xn_ref, xs_ref, w_ref, b_ref,
                      o_ref, acc_ref, *, apply_relu, xn_resident):
    """One SAGEConv layer, tiled over (row block i, neighbor block k).

    a_ref   : (tm, tk)        int8  unnormalized adjacency tile (edge counts)
    invd_ref: (tm, 1)         f32   1 / max(in-degree, 1) for these rows
    xn_ref  : (tk|Npad, Fin)  bf16  neighbor features (k block or resident)
    xs_ref  : (tm, Fin)       bf16  self features (i block)
    w_ref   : (2*Fin, Fout)   bf16  [W_l; W_r] stacked, VMEM resident
    b_ref   : (1, Fout)       f32   lin_l bias, VMEM resident
    o_ref   : (tm, Fout)            output tile
    acc_ref : (tm, Fin)       f32   neighbor-sum accumulator (VMEM scratch)
    """
    k = pl.program_id(1)

    @pl.when(k == 0)
    def _():
        acc_ref[...] = jnp.zeros_like(acc_ref)

    # int8 -> bf16 upcast on the VPU (hidden under the A DMA), then accumulate
    # sum_j A[i, j] * x[j] for this k block on the MXU with f32 accumulation.
    a_bf16 = a_ref[...].astype(jnp.bfloat16)
    if xn_resident:
        tk = a_ref.shape[1]
        start = pl.multiple_of(k * tk, 128)
        xn = xn_ref[pl.ds(start, tk), :]
    else:
        xn = xn_ref[...]
    acc_ref[...] += jnp.dot(a_bf16, xn, preferred_element_type=jnp.float32)

    @pl.when(k == pl.num_programs(1) - 1)
    def _():
        # Mean = sum * (1/deg); zero-degree rows have an all-zero sum and
        # inv_deg = 1, so they stay exactly 0 (mean of empty neighborhood).
        agg = (acc_ref[...] * invd_ref[...]).astype(jnp.bfloat16)
        # Fused epilogue: [mean_agg | x_self] @ [W_l; W_r] in one K=2*Fin matmul.
        lhs = jnp.concatenate([agg, xs_ref[...]], axis=1)
        h = jnp.dot(lhs, w_ref[...], preferred_element_type=jnp.float32)
        h = h + b_ref[...]
        if apply_relu:
            h = jnp.maximum(h, 0.0)
        o_ref[...] = h.astype(o_ref.dtype)


def _sage_layer(a_i8, inv_deg, x, w, b, *, apply_relu, out_dtype, tm, tk,
                xn_resident, vmem_limit_bytes):
    """pallas_call wrapper for one SAGEConv layer on padded, aligned operands."""
    npad = a_i8.shape[0]
    fin = x.shape[1]
    fout = w.shape[1]
    grid = (npad // tm, npad // tk)

    if xn_resident:
        xn_spec = pl.BlockSpec((npad, fin), lambda i, k: (0, 0))   # DMA'd once
        xn_bytes = npad * fin * 2
    else:
        xn_spec = pl.BlockSpec((tk, fin), lambda i, k: (k, 0))     # re-streamed
        xn_bytes = grid[0] * npad * fin * 2

    flops = 2 * npad * npad * fin + 2 * npad * (2 * fin) * fout
    bytes_accessed = (a_i8.size * 1
                      + xn_bytes
                      + npad * fin * 2                 # self features
                      + npad * 4                       # inv_deg
                      + w.size * 2 + b.size * 4
                      + npad * fout * jnp.dtype(out_dtype).itemsize)

    return pl.pallas_call(
        functools.partial(sage_layer_kernel, apply_relu=apply_relu,
                          xn_resident=xn_resident),
        out_shape=jax.ShapeDtypeStruct((npad, fout), out_dtype),
        grid_spec=pltpu.PrefetchScalarGridSpec(
            num_scalar_prefetch=0,
            grid=grid,
            in_specs=[
                pl.BlockSpec((tm, tk), lambda i, k: (i, k)),        # A (int8)
                pl.BlockSpec((tm, 1), lambda i, k: (i, 0)),         # 1/deg
                xn_spec,                                            # x neighbors
                pl.BlockSpec((tm, fin), lambda i, k: (i, 0)),       # x self
                pl.BlockSpec((2 * fin, fout), lambda i, k: (0, 0)), # [Wl;Wr]
                pl.BlockSpec((1, fout), lambda i, k: (0, 0)),       # bias
            ],
            out_specs=pl.BlockSpec((tm, fout), lambda i, k: (i, 0)),
            scratch_shapes=[pltpu.VMEM((tm, fin), jnp.float32)],
        ),
        compiler_params=pltpu.CompilerParams(
            dimension_semantics=("parallel", "arbitrary"),
            vmem_limit_bytes=vmem_limit_bytes),
        cost_estimate=pl.CostEstimate(
            flops=flops, transcendentals=0, bytes_accessed=bytes_accessed),
    )(a_i8, inv_deg, x, x, w, b)


def build_adjacency_and_inv_degree(edge_index, num_nodes_padded):
    """int8 adjacency (exact small-integer edge counts) + exact f32 1/deg.

    edge_index[0] = source nodes (messages come from here),
    edge_index[1] = target nodes (messages aggregated here), matching PyG.
    Padded rows/columns stay all-zero so padded nodes never enter any mean.
    int8 holds edge multiplicities up to 127; degrees are computed in f32
    before the cast and remain exact.
    """
    # TODO(synk): for genuinely sparse graphs (E << N^2) replace this dense
    # O(N^2) adjacency with a CSR gather path (scalar-prefetched row pointers
    # in SMEM + manual make_async_copy of neighbor feature rows).
    # TODO(synk): guard/clip parallel-edge multiplicities > 127 before the
    # int8 cast if such multigraphs are expected.
    src = edge_index[0]
    tgt = edge_index[1]
    adj = jnp.zeros((num_nodes_padded, num_nodes_padded), jnp.float32)
    adj = adj.at[tgt, src].add(1.0)
    deg = jnp.sum(adj, axis=1, keepdims=True)           # (Npad, 1) f32, exact
    inv_deg = 1.0 / jnp.maximum(deg, 1.0)               # exact f32 reciprocal
    return adj.astype(jnp.int8), inv_deg


@functools.partial(jax.jit,
                   static_argnames=("block_rows", "block_cols", "xn_residency"))
def gnn_encoder(x, edge_index, params, *, block_rows=1024, block_cols=4096,
                xn_residency=True):
    """Fused 2-layer SAGE forward.  x: (N, Fin) f32, edge_index: (2, E) int32."""
    n, fin = x.shape
    wl1, wr1, b1, wl2, wr2, b2 = params
    hidden = wl1.shape[1]
    out_ch = wl2.shape[1]

    # Lane-align feature dims.
    fin_p = _round_up(fin, 128)
    hid_p = _round_up(hidden, 128)
    out_p = _round_up(out_ch, 128)
    n128 = _round_up(n, 128)

    fin_max = max(fin_p, hid_p)
    fout_max = max(hid_p, out_p)

    # Decoupled row / reduction tiles, clamped to the (128-aligned) node count.
    tm = min(_round_up(block_rows, 128), n128)
    tk = min(_round_up(block_cols, 128), n128)

    # Per-generation VMEM budget; shrink tiles if the streamed layout won't fit.
    vmem_cap = _vmem_capacity_bytes()
    vmem_budget = int(0.70 * vmem_cap)
    while (_layer_vmem_bytes(tm, tk, n128, fin_max, fout_max, 4, False)
           > vmem_budget and (tk > 512 or tm > 512)):
        if tk >= tm and tk > 512:
            tk = max(512, _round_up(tk // 2, 128))
        else:
            tm = max(512, _round_up(tm // 2, 128))

    # Pad node count so both grid axes divide evenly.
    npad = _round_up(n, math.lcm(tm, tk))

    # Prefer >= 2 row blocks so both v7x TensorCores get work (no-op elsewhere).
    if npad // tm < 2 and npad % 256 == 0 and npad // 2 >= 128:
        tm = npad // 2

    # Keep neighbor features fully VMEM-resident when they fit the budget
    # (removes the per-row-block re-stream of x / h1).
    xn_resident = bool(xn_residency) and (
        _layer_vmem_bytes(tm, tk, npad, fin_max, fout_max, 4, True)
        <= vmem_budget)

    need = _layer_vmem_bytes(tm, tk, npad, fin_max, fout_max, 4, xn_resident)
    vmem_limit = int(min(max(need + (4 << 20), 32 << 20), int(0.85 * vmem_cap)))

    a_i8, inv_deg = build_adjacency_and_inv_degree(edge_index, npad)
    x_p = jnp.zeros((npad, fin_p), jnp.bfloat16).at[:n, :fin].set(
        x.astype(jnp.bfloat16))

    def pad_stack_w(wl, wr, fin_pad, fout_pad):
        """Stack [W_l; W_r] into one (2*fin_pad, fout_pad) bf16 weight."""
        w = jnp.zeros((2 * fin_pad, fout_pad), jnp.bfloat16)
        w = w.at[:wl.shape[0], :wl.shape[1]].set(wl.astype(jnp.bfloat16))
        w = w.at[fin_pad:fin_pad + wr.shape[0], :wr.shape[1]].set(
            wr.astype(jnp.bfloat16))
        return w

    def pad_b(b, c):
        return jnp.zeros((1, c), jnp.float32).at[:, :b.shape[1]].set(
            b.astype(jnp.float32))

    w1 = pad_stack_w(wl1, wr1, fin_p, hid_p)
    w2 = pad_stack_w(wl2, wr2, hid_p, out_p)
    b1_p = pad_b(b1, hid_p)
    b2_p = pad_b(b2, out_p)

    # Layer 1 (SAGEConv + ReLU) -> bf16 h1; Layer 2 (SAGEConv) -> f32 out.
    # Two pipelined pallas_calls: layer 2's aggregation needs h1 for ALL nodes.
    h1 = _sage_layer(a_i8, inv_deg, x_p, w1, b1_p,
                     apply_relu=True, out_dtype=jnp.bfloat16, tm=tm, tk=tk,
                     xn_resident=xn_resident, vmem_limit_bytes=vmem_limit)
    out = _sage_layer(a_i8, inv_deg, h1, w2, b2_p,
                      apply_relu=False, out_dtype=jnp.float32, tm=tm, tk=tk,
                      xn_resident=xn_resident, vmem_limit_bytes=vmem_limit)
    return out[:n, :out_ch]


def init_params(key, in_channels, hidden_channels, out_channels):
    """Synthetic params; shapes follow PyG SAGEConv (lin_l has bias, lin_r not).

    Weights stored (in, out) so the kernel does x @ W directly (same math as
    PyTorch's x @ W^T with W stored (out, in))."""
    ks = jax.random.split(key, 6)
    scale = 0.1
    wl1 = scale * jax.random.normal(ks[0], (in_channels, hidden_channels), jnp.float32)
    wr1 = scale * jax.random.normal(ks[1], (in_channels, hidden_channels), jnp.float32)
    b1 = scale * jax.random.normal(ks[2], (1, hidden_channels), jnp.float32)
    wl2 = scale * jax.random.normal(ks[3], (hidden_channels, out_channels), jnp.float32)
    wr2 = scale * jax.random.normal(ks[4], (hidden_channels, out_channels), jnp.float32)
    b2 = scale * jax.random.normal(ks[5], (1, out_channels), jnp.float32)
    return wl1, wr1, b1, wl2, wr2, b2


def gnn_encoder_ref(x, edge_index, params):
    """Pure-JAX f32 reference of the same forward (correctness check)."""
    n = x.shape[0]
    src, tgt = edge_index[0], edge_index[1]
    adj = jnp.zeros((n, n), jnp.float32).at[tgt, src].add(1.0)
    deg = jnp.sum(adj, axis=1, keepdims=True)
    a = jnp.where(deg > 0, adj / jnp.maximum(deg, 1.0), 0.0)
    wl1, wr1, b1, wl2, wr2, b2 = params
    h1 = jnp.maximum(a @ x @ wl1 + x @ wr1 + b1, 0.0)
    return a @ h1 @ wl2 + h1 @ wr2 + b2


if __name__ == "__main__":
    key = jax.random.PRNGKey(0)
    k_x, k_e, k_p = jax.random.split(key, 3)

    num_nodes = 300
    in_channels = 8
    hidden_channels = 32
    out_channels = 16
    num_edges = 2000

    x = jax.random.normal(k_x, (num_nodes, in_channels), jnp.float32)
    edge_index = jax.random.randint(k_e, (2, num_edges), 0, num_nodes, jnp.int32)
    params = init_params(k_p, in_channels, hidden_channels, out_channels)

    ref = gnn_encoder_ref(x, edge_index, params)

    # Small 128x128 blocks so this demo exercises a multi-block (i, k) grid with
    # cross-block accumulation (both with the VMEM-resident neighbor operand and
    # with the streamed fallback); real graphs use the 1024x4096 defaults.
    out_resident = gnn_encoder(x, edge_index, params,
                               block_rows=128, block_cols=128)
    out_resident = jax.block_until_ready(out_resident)

    out_streamed = gnn_encoder(x, edge_index, params,
                               block_rows=128, block_cols=128,
                               xn_residency=False)
    out_streamed = jax.block_until_ready(out_streamed)

    assert out_resident.shape == (num_nodes, out_channels)
    assert out_streamed.shape == (num_nodes, out_channels)
    for name, out in (("resident", out_resident), ("streamed", out_streamed)):
        max_err = float(jnp.max(jnp.abs(out - ref)))
        assert jnp.allclose(out, ref, atol=2e-2, rtol=2e-2), \
            f"{name}: max abs err={max_err}"

    print("KERNEL_OK")
</pallas_src>

<mosaic_0001>
module attributes {stable_mosaic.version = 11 : i64} {
  func.func @sage_layer_kernel(%arg0: i32, %arg1: i32, %arg2: memref<128x128xi8, #tpu.memory_space<vmem>>, %arg3: memref<128x1xf32, #tpu.memory_space<vmem>>, %arg4: memref<384x128xbf16, #tpu.memory_space<vmem>>, %arg5: memref<128x128xbf16, #tpu.memory_space<vmem>>, %arg6: memref<256x128xbf16, #tpu.memory_space<vmem>>, %arg7: memref<1x128xf32, #tpu.memory_space<vmem>>, %arg8: memref<128x128xbf16, #tpu.memory_space<vmem>>, %arg9: memref<128x128xf32, #tpu.memory_space<vmem>>) attributes {dimension_semantics = [#tpu.dimension_semantics<parallel>, #tpu.dimension_semantics<arbitrary>], iteration_bounds = array<i64: 3, 3>, scalar_prefetch = 0 : i64, scratch_operands = 1 : i64, tpu.core_type = #tpu.core_type<tc>, window_params = [{transform_indices = @transform_0, window_bounds = array<i64: 128, 128>}, {transform_indices = @transform_1, window_bounds = array<i64: 128, 1>}, {pipeline_mode = #tpu.pipeline_mode<synchronous>, transform_indices = @transform_2, window_bounds = array<i64: 384, 128>}, {transform_indices = @transform_3, window_bounds = array<i64: 128, 128>}, {pipeline_mode = #tpu.pipeline_mode<synchronous>, transform_indices = @transform_4, window_bounds = array<i64: 256, 128>}, {pipeline_mode = #tpu.pipeline_mode<synchronous>, transform_indices = @transform_5, window_bounds = array<i64: 1, 128>}, {transform_indices = @transform_6, window_bounds = array<i64: 128, 128>}]} {
    %c0_i32 = arith.constant 0 : i32
    %0 = arith.cmpi eq, %arg1, %c0_i32 : i32
    %1 = arith.extui %0 : i1 to i32
    %c0_i32_0 = arith.constant 0 : i32
    %2 = arith.cmpi ne, %1, %c0_i32_0 : i32
    scf.if %2 {
      %cst_8 = arith.constant 0.000000e+00 : f32
      %16 = vector.broadcast %cst_8 : f32 to vector<128x128xf32>
      %c0_9 = arith.constant 0 : index
      %c0_10 = arith.constant 0 : index
      %17 = vector.load %arg9[%c0_9, %c0_10] : memref<128x128xf32, #tpu.memory_space<vmem>>, vector<128x128xf32>
      tpu.vector_store %arg9[%c0_9, %c0_10], %16 {strides = array<i32>} : memref<128x128xf32, #tpu.memory_space<vmem>>, vector<128x128xf32>,
    } else {
    }
    %c0 = arith.constant 0 : index
    %c0_1 = arith.constant 0 : index
    %3 = vector.load %arg2[%c0, %c0_1] : memref<128x128xi8, #tpu.memory_space<vmem>>, vector<128x128xi8>
    %4 = arith.sitofp %3 : vector<128x128xi8> to vector<128x128xbf16>
    %c128_i32 = arith.constant 128 : i32
    %5 = arith.muli %arg1, %c128_i32 : i32
    %6 = tpu.assume_multiple %5, 128 : i32
    %7 = arith.index_cast %6 : i32 to index
    %c0_2 = arith.constant 0 : index
    %8 = vector.load %arg4[%7, %c0_2] : memref<384x128xbf16, #tpu.memory_space<vmem>>, vector<128x128xbf16>
    %c0_3 = arith.constant 0 : index
    %c0_4 = arith.constant 0 : index
    %9 = vector.load %arg9[%c0_3, %c0_4] : memref<128x128xf32, #tpu.memory_space<vmem>>, vector<128x128xf32>
    %cst = arith.constant dense<0.000000e+00> : vector<128x128xf32>
    %10 = tpu.matmul %4, %8, %cst {dimension_numbers = #tpu.dot_dimension_numbers<[1], [0], [0], [1], [0, 0, 1, 1], [], []>} : vector<128x128xbf16>, vector<128x128xbf16>, vector<128x128xf32> -> vector<128x128xf32>
    %11 = arith.addf %9, %10 : vector<128x128xf32>
    %c0_5 = arith.constant 0 : index
    %c0_6 = arith.constant 0 : index
    %12 = vector.load %arg9[%c0_5, %c0_6] : memref<128x128xf32, #tpu.memory_space<vmem>>, vector<128x128xf32>
    tpu.vector_store %arg9[%c0_5, %c0_6], %11 {strides = array<i32>} : memref<128x128xf32, #tpu.memory_space<vmem>>, vector<128x128xf32>,
    %c2_i32 = arith.constant 2 : i32
    %13 = arith.cmpi eq, %arg1, %c2_i32 : i32
    %14 = arith.extui %13 : i1 to i32
    %c0_i32_7 = arith.constant 0 : i32
    %15 = arith.cmpi ne, %14, %c0_i32_7 : i32
    scf.if %15 {
      %c0_8 = arith.constant 0 : index
      %c0_9 = arith.constant 0 : index
      %16 = vector.load %arg9[%c0_8, %c0_9] : memref<128x128xf32, #tpu.memory_space<vmem>>, vector<128x128xf32>
      %c0_10 = arith.constant 0 : index
      %c0_11 = arith.constant 0 : index
      %17 = vector.load %arg3[%c0_10, %c0_11] : memref<128x1xf32, #tpu.memory_space<vmem>>, vector<128x1xf32>
      %18 = vector.broadcast %17 : vector<128x1xf32> to vector<128x128xf32>
      %19 = arith.mulf %16, %18 : vector<128x128xf32>
      %20 = arith.truncf %19 : vector<128x128xf32> to vector<128x128xbf16>
      %c0_12 = arith.constant 0 : index
      %c0_13 = arith.constant 0 : index
      %21 = vector.load %arg5[%c0_12, %c0_13] : memref<128x128xbf16, #tpu.memory_space<vmem>>, vector<128x128xbf16>
      %22 = tpu.concatenate %20, %21 in 1 : vector<128x128xbf16>, vector<128x128xbf16> -> vector<128x256xbf16>
      %c0_14 = arith.constant 0 : index
      %c0_15 = arith.constant 0 : index
      %23 = vector.load %arg6[%c0_14, %c0_15] : memref<256x128xbf16, #tpu.memory_space<vmem>>, vector<256x128xbf16>
      %cst_16 = arith.constant dense<0.000000e+00> : vector<128x128xf32>
      %24 = tpu.matmul %22, %23, %cst_16 {dimension_numbers = #tpu.dot_dimension_numbers<[1], [0], [0], [1], [0, 0, 1, 1], [], []>} : vector<128x256xbf16>, vector<256x128xbf16>, vector<128x128xf32> -> vector<128x128xf32>
      %c0_17 = arith.constant 0 : index
      %c0_18 = arith.constant 0 : index
      %25 = vector.load %arg7[%c0_17, %c0_18] : memref<1x128xf32, #tpu.memory_space<vmem>>, vector<1x128xf32>
      %26 = vector.broadcast %25 : vector<1x128xf32> to vector<128x128xf32>
      %27 = arith.addf %24, %26 : vector<128x128xf32>
      %cst_19 = arith.constant 0.000000e+00 : f32
      %28 = vector.broadcast %cst_19 : f32 to vector<128x128xf32>
      %29 = arith.maximumf %27, %28 : vector<128x128xf32>
      %30 = arith.truncf %29 : vector<128x128xf32> to vector<128x128xbf16>
      %c0_20 = arith.constant 0 : index
      %c0_21 = arith.constant 0 : index
      %31 = vector.load %arg8[%c0_20, %c0_21] : memref<128x128xbf16, #tpu.memory_space<vmem>>, vector<128x128xbf16>
      tpu.vector_store %arg8[%c0_20, %c0_21], %30 {strides = array<i32>} : memref<128x128xbf16, #tpu.memory_space<vmem>>, vector<128x128xbf16>,
    } else {
    }
    return
  }
  func.func @transform_0(%arg0: i32, %arg1: i32) -> (i32, i32) {
    %c0_i32 = arith.constant 0 : i32
    return %arg0, %arg1 : i32, i32
  }
  func.func @transform_1(%arg0: i32, %arg1: i32) -> (i32, i32) {
    %c0_i32 = arith.constant 0 : i32
    %c0_i32_0 = arith.constant 0 : i32
    return %arg0, %c0_i32 : i32, i32
  }
  func.func @transform_2(%arg0: i32, %arg1: i32) -> (i32, i32) {
    %c0_i32 = arith.constant 0 : i32
    %c0_i32_0 = arith.constant 0 : i32
    %c0_i32_1 = arith.constant 0 : i32
    return %c0_i32, %c0_i32_0 : i32, i32
  }
  func.func @transform_3(%arg0: i32, %arg1: i32) -> (i32, i32) {
    %c0_i32 = arith.constant 0 : i32
    %c0_i32_0 = arith.constant 0 : i32
    return %arg0, %c0_i32 : i32, i32
  }
  func.func @transform_4(%arg0: i32, %arg1: i32) -> (i32, i32) {
    %c0_i32 = arith.constant 0 : i32
    %c0_i32_0 = arith.constant 0 : i32
    %c0_i32_1 = arith.constant 0 : i32
    return %c0_i32, %c0_i32_0 : i32, i32
  }
  func.func @transform_5(%arg0: i32, %arg1: i32) -> (i32, i32) {
    %c0_i32 = arith.constant 0 : i32
    %c0_i32_0 = arith.constant 0 : i32
    %c0_i32_1 = arith.constant 0 : i32
    return %c0_i32, %c0_i32_0 : i32, i32
  }
  func.func @transform_6(%arg0: i32, %arg1: i32) -> (i32, i32) {
    %c0_i32 = arith.constant 0 : i32
    %c0_i32_0 = arith.constant 0 : i32
    return %arg0, %c0_i32 : i32, i32
  }
}

module attributes {stable_mosaic.version = 11 : i64} {
  func.func @sage_layer_kernel(%arg0: i32, %arg1: i32, %arg2: memref<128x128xi8, #tpu.memory_space<vmem>>, %arg3: memref<128x1xf32, #tpu.memory_space<vmem>>, %arg4: memref<384x128xbf16, #tpu.memory_space<vmem>>, %arg5: memref<128x128xbf16, #tpu.memory_space<vmem>>, %arg6: memref<256x128xbf16, #tpu.memory_space<vmem>>, %arg7: memref<1x128xf32, #tpu.memory_space<vmem>>, %arg8: memref<128x128xf32, #tpu.memory_space<vmem>>, %arg9: memref<128x128xf32, #tpu.memory_space<vmem>>) attributes {dimension_semantics = [#tpu.dimension_semantics<parallel>, #tpu.dimension_semantics<arbitrary>], iteration_bounds = array<i64: 3, 3>, scalar_prefetch = 0 : i64, scratch_operands = 1 : i64, tpu.core_type = #tpu.core_type<tc>, window_params = [{transform_indices = @transform_0, window_bounds = array<i64: 128, 128>}, {transform_indices = @transform_1, window_bounds = array<i64: 128, 1>}, {pipeline_mode = #tpu.pipeline_mode<synchronous>, transform_indices = @transform_2, window_bounds = array<i64: 384, 128>}, {transform_indices = @transform_3, window_bounds = array<i64: 128, 128>}, {pipeline_mode = #tpu.pipeline_mode<synchronous>, transform_indices = @transform_4, window_bounds = array<i64: 256, 128>}, {pipeline_mode = #tpu.pipeline_mode<synchronous>, transform_indices = @transform_5, window_bounds = array<i64: 1, 128>}, {transform_indices = @transform_6, window_bounds = array<i64: 128, 128>}]} {
    %c0_i32 = arith.constant 0 : i32
    %0 = arith.cmpi eq, %arg1, %c0_i32 : i32
    %1 = arith.extui %0 : i1 to i32
    %c0_i32_0 = arith.constant 0 : i32
    %2 = arith.cmpi ne, %1, %c0_i32_0 : i32
    scf.if %2 {
      %cst_8 = arith.constant 0.000000e+00 : f32
      %16 = vector.broadcast %cst_8 : f32 to vector<128x128xf32>
      %c0_9 = arith.constant 0 : index
      %c0_10 = arith.constant 0 : index
      %17 = vector.load %arg9[%c0_9, %c0_10] : memref<128x128xf32, #tpu.memory_space<vmem>>, vector<128x128xf32>
      tpu.vector_store %arg9[%c0_9, %c0_10], %16 {strides = array<i32>} : memref<128x128xf32, #tpu.memory_space<vmem>>, vector<128x128xf32>,
    } else {
    }
    %c0 = arith.constant 0 : index
    %c0_1 = arith.constant 0 : index
    %3 = vector.load %arg2[%c0, %c0_1] : memref<128x128xi8, #tpu.memory_space<vmem>>, vector<128x128xi8>
    %4 = arith.sitofp %3 : vector<128x128xi8> to vector<128x128xbf16>
    %c128_i32 = arith.constant 128 : i32
    %5 = arith.muli %arg1, %c128_i32 : i32
    %6 = tpu.assume_multiple %5, 128 : i32
    %7 = arith.index_cast %6 : i32 to index
    %c0_2 = arith.constant 0 : index
    %8 = vector.load %arg4[%7, %c0_2] : memref<384x128xbf16, #tpu.memory_space<vmem>>, vector<128x128xbf16>
    %c0_3 = arith.constant 0 : index
    %c0_4 = arith.constant 0 : index
    %9 = vector.load %arg9[%c0_3, %c0_4] : memref<128x128xf32, #tpu.memory_space<vmem>>, vector<128x128xf32>
    %cst = arith.constant dense<0.000000e+00> : vector<128x128xf32>
    %10 = tpu.matmul %4, %8, %cst {dimension_numbers = #tpu.dot_dimension_numbers<[1], [0], [0], [1], [0, 0, 1, 1], [], []>} : vector<128x128xbf16>, vector<128x128xbf16>, vector<128x128xf32> -> vector<128x128xf32>
    %11 = arith.addf %9, %10 : vector<128x128xf32>
    %c0_5 = arith.constant 0 : index
    %c0_6 = arith.constant 0 : index
    %12 = vector.load %arg9[%c0_5, %c0_6] : memref<128x128xf32, #tpu.memory_space<vmem>>, vector<128x128xf32>
    tpu.vector_store %arg9[%c0_5, %c0_6], %11 {strides = array<i32>} : memref<128x128xf32, #tpu.memory_space<vmem>>, vector<128x128xf32>,
    %c2_i32 = arith.constant 2 : i32
    %13 = arith.cmpi eq, %arg1, %c2_i32 : i32
    %14 = arith.extui %13 : i1 to i32
    %c0_i32_7 = arith.constant 0 : i32
    %15 = arith.cmpi ne, %14, %c0_i32_7 : i32
    scf.if %15 {
      %c0_8 = arith.constant 0 : index
      %c0_9 = arith.constant 0 : index
      %16 = vector.load %arg9[%c0_8, %c0_9] : memref<128x128xf32, #tpu.memory_space<vmem>>, vector<128x128xf32>
      %c0_10 = arith.constant 0 : index
      %c0_11 = arith.constant 0 : index
      %17 = vector.load %arg3[%c0_10, %c0_11] : memref<128x1xf32, #tpu.memory_space<vmem>>, vector<128x1xf32>
      %18 = vector.broadcast %17 : vector<128x1xf32> to vector<128x128xf32>
      %19 = arith.mulf %16, %18 : vector<128x128xf32>
      %20 = arith.truncf %19 : vector<128x128xf32> to vector<128x128xbf16>
      %c0_12 = arith.constant 0 : index
      %c0_13 = arith.constant 0 : index
      %21 = vector.load %arg5[%c0_12, %c0_13] : memref<128x128xbf16, #tpu.memory_space<vmem>>, vector<128x128xbf16>
      %22 = tpu.concatenate %20, %21 in 1 : vector<128x128xbf16>, vector<128x128xbf16> -> vector<128x256xbf16>
      %c0_14 = arith.constant 0 : index
      %c0_15 = arith.constant 0 : index
      %23 = vector.load %arg6[%c0_14, %c0_15] : memref<256x128xbf16, #tpu.memory_space<vmem>>, vector<256x128xbf16>
      %cst_16 = arith.constant dense<0.000000e+00> : vector<128x128xf32>
      %24 = tpu.matmul %22, %23, %cst_16 {dimension_numbers = #tpu.dot_dimension_numbers<[1], [0], [0], [1], [0, 0, 1, 1], [], []>} : vector<128x256xbf16>, vector<256x128xbf16>, vector<128x128xf32> -> vector<128x128xf32>
      %c0_17 = arith.constant 0 : index
      %c0_18 = arith.constant 0 : index
      %25 = vector.load %arg7[%c0_17, %c0_18] : memref<1x128xf32, #tpu.memory_space<vmem>>, vector<1x128xf32>
      %26 = vector.broadcast %25 : vector<1x128xf32> to vector<128x128xf32>
      %27 = arith.addf %24, %26 : vector<128x128xf32>
      %c0_19 = arith.constant 0 : index
      %c0_20 = arith.constant 0 : index
      %28 = vector.load %arg8[%c0_19, %c0_20] : memref<128x128xf32, #tpu.memory_space<vmem>>, vector<128x128xf32>
      tpu.vector_store %arg8[%c0_19, %c0_20], %27 {strides = array<i32>} : memref<128x128xf32, #tpu.memory_space<vmem>>, vector<128x128xf32>,
    } else {
    }
    return
  }
  func.func @transform_0(%arg0: i32, %arg1: i32) -> (i32, i32) {
    %c0_i32 = arith.constant 0 : i32
    return %arg0, %arg1 : i32, i32
  }
  func.func @transform_1(%arg0: i32, %arg1: i32) -> (i32, i32) {
    %c0_i32 = arith.constant 0 : i32
    %c0_i32_0 = arith.constant 0 : i32
    return %arg0, %c0_i32 : i32, i32
  }
  func.func @transform_2(%arg0: i32, %arg1: i32) -> (i32, i32) {
    %c0_i32 = arith.constant 0 : i32
    %c0_i32_0 = arith.constant 0 : i32
    %c0_i32_1 = arith.constant 0 : i32
    return %c0_i32, %c0_i32_0 : i32, i32
  }
  func.func @transform_3(%arg0: i32, %arg1: i32) -> (i32, i32) {
    %c0_i32 = arith.constant 0 : i32
    %c0_i32_0 = arith.constant 0 : i32
    return %arg0, %c0_i32 : i32, i32
  }
  func.func @transform_4(%arg0: i32, %arg1: i32) -> (i32, i32) {
    %c0_i32 = arith.constant 0 : i32
    %c0_i32_0 = arith.constant 0 : i32
    %c0_i32_1 = arith.constant 0 : i32
    return %c0_i32, %c0_i32_0 : i32, i32
  }
  func.func @transform_5(%arg0: i32, %arg1: i32) -> (i32, i32) {
    %c0_i32 = arith.constant 0 : i32
    %c0_i32_0 = arith.constant 0 : i32
    %c0_i32_1 = arith.constant 0 : i32
    return %c0_i32, %c0_i32_0 : i32, i32
  }
  func.func @transform_6(%arg0: i32, %arg1: i32) -> (i32, i32) {
    %c0_i32 = arith.constant 0 : i32
    %c0_i32_0 = arith.constant 0 : i32
    return %arg0, %c0_i32 : i32, i32
  }
}

</mosaic_0001>

<llo_original>
// kernel: gnn_encoder.2
$region0: #{gnn_encoder.2}
  #allocation0 [shape = 'u32[]', space=smem, size = 0x4, offset = 0x4, fixed_abs, tag = 'smem constant byte address 0x4 - core index']
  #allocation1 [shape = 'u32[72,128]{1,0:T(1,128)}', space=vmem, size = 0x9000, scoped, tag = 'internal scratch']
  #allocation2 [shape = 'f32[128,128]{1,0:T(8,128)}', space=vmem, size = 0x10000, scoped, tag = 'scratch operand']
  %s0 = inlined_call_operand.vmem [shape: s8[384,384], index: 0, kind: input, shape index: {}]
  %s1 = inlined_call_operand.vmem [shape: f32[384,1], index: 1, kind: input, shape index: {}]
  %s2 = inlined_call_operand.vmem [shape: bf16[384,128], index: 2, kind: input, shape index: {}, may-alias: {2,3}]
  %s3 = inlined_call_operand.vmem [shape: bf16[384,128], index: 3, kind: input, shape index: {}, may-alias: {2,3}]
  %s4 = inlined_call_operand.vmem [shape: bf16[256,128], index: 4, kind: input, shape index: {}]
  %s5 = inlined_call_operand.vmem [shape: f32[1,128], index: 5, kind: input, shape index: {}]
  %s6 = inlined_call_operand.vmem [shape: bf16[384,128], index: 6, kind: output, shape index: {}]
  %s7 = sld [smem:[#allocation0]]
  $region103: #{gnn_encoder.2} parent=0
    _
  %s9 = ssub.s32 1, %s7
  %s10 = scalar_select 0, %s9, %s7
  $region1: #{gnn_encoder.2} parent=0
    #allocation3 [shape = 'u8[32768]{0}', space=vmem, size = 0x8000, scoped, tag = 'input window, operand 0']
    loop: start=0, step=1, limit=11
    $region2: #{gnn_encoder.2} parent=1 // loop_pre_header
      _
    $region3: #{gnn_encoder.2} parent=1 // loop_header
      %s12 = sphi 0, %s16
      %p13 = scmp.ge.s32.totalorder %s12, 11
      %s19 = sphi 0, %s31
      %s20 = sphi 0, %s27
      %s21 = sphi 0, %s19
      %s22 = sphi 0, %s20
      %s23 = sphi 0, %s21
      %s24 = sphi 0, %s22
      %s36 = sphi 0, %s38
      %s39 = sphi 0, %s36
      %s40 = sphi 0, %s39
      %s56 = sphi 0, %s40
      %s62 = sphi 0, %s64
      %s65 = sphi 0, %s62
      %s66 = sphi 0, %s65
      %s82 = sphi 0, %s66
      %s86 = sphi 0, %s86
      %s88 = sphi 0, %s86
      %s89 = sphi 0, %s88
      %s103 = sphi 0, %s89
      %s109 = sphi 0, %s111
      %s112 = sphi 0, %s109
      %s113 = sphi 0, %s112
      %s129 = sphi 0, %s113
      %s133 = sphi 0, %s133
      %s135 = sphi 0, %s133
      %s136 = sphi 0, %s135
      %s150 = sphi 0, %s136
      %s154 = sphi 0, %s154
      %s156 = sphi 0, %s154
      %s157 = sphi 0, %s156
      %s171 = sphi 0, %s157
      %s177 = sphi 0, %s179
      %s180 = sphi 0, %s177
      %s181 = sphi 0, %s180
      %s197 = sphi 0, %s181
    $region4: #{gnn_encoder.2} parent=1 // loop_header_branch
      %15 = sbr.rel (%p13) target = $region8
    $region5: #{gnn_encoder.2} parent=1 // loop_body
      %s17 = ssub.s32 %s12, 1
      %s18 = ssub.s32 %s12, 2
      %s25 = sadd.s32 1, %s20
      %p26 = scmp.ge.s32.totalorder %s25, 3
      %s27 = scalar_select %p26, 0, %s25
      %s28 = sadd.s32 1, %s19
      %s29 = scalar_select %p26, %s28, %s19
      %p30 = scmp.ge.s32.totalorder %s29, 3
      %s31 = scalar_select %p30, 0, %s29
      %s32 = ssub.s32 %s19, %s31
      %s33 = ssub.s32 %s20, %s27
      %s34 = sor.u32 %s32, %s33
      %p35 = scmp.eq.s32.totalorder %s34, 0
      %s37 = sadd.s32 %s36, 1
      %s38 = scalar_select %p35, %s36, %s37
      %p41 = pneg %p35
      %p42 = scmp.eq.s32.totalorder %s12, 8
      %p43 = por %p41, %p42
      %p44 = scmp.ne.s32.totalorder %s36, %s39
      %p45 = scmp.eq.s32.totalorder %s12, 0
      %p46 = por %p44, %p45
      %p47 = scmp.ne.s32.totalorder %s36, %s39
      %p48 = scmp.eq.s32.totalorder %s17, 8
      %p49 = por %p47, %p48
      %p50 = scmp.ne.s32.totalorder %s39, %s40
      %p51 = scmp.eq.s32.totalorder %s17, 0
      %p52 = por %p50, %p51
      %p53 = scmp.ne.s32.totalorder %s39, %s40
      %p54 = scmp.eq.s32.totalorder %s18, 8
      %p55 = por %p53, %p54
      %p57 = scmp.ne.s32.totalorder %s40, %s56
      %p58 = scmp.eq.s32.totalorder %s18, 0
      %p59 = por %p57, %p58
      %s60 = ssub.s32 %s19, %s31
      %p61 = scmp.eq.s32.totalorder %s60, 0
      %s63 = sadd.s32 %s62, 1
      %s64 = scalar_select %p61, %s62, %s63
      %p67 = pneg %p61
      %p68 = scmp.eq.s32.totalorder %s12, 8
      %p69 = por %p67, %p68
      %p70 = scmp.ne.s32.totalorder %s62, %s65
      %p71 = scmp.eq.s32.totalorder %s12, 0
      %p72 = por %p70, %p71
      %p73 = scmp.ne.s32.totalorder %s62, %s65
      %p74 = scmp.eq.s32.totalorder %s17, 8
      %p75 = por %p73, %p74
      %p76 = scmp.ne.s32.totalorder %s65, %s66
      %p77 = scmp.eq.s32.totalorder %s17, 0
      %p78 = por %p76, %p77
      %p79 = scmp.ne.s32.totalorder %s65, %s66
      %p80 = scmp.eq.s32.totalorder %s18, 8
      %p81 = por %p79, %p80
      %p83 = scmp.ne.s32.totalorder %s66, %s82
      %p84 = scmp.eq.s32.totalorder %s18, 0
      %p85 = por %p83, %p84
      %s87 = sadd.s32 %s86, 1
      %p90 = scmp.eq.s32.totalorder %s12, 8
      %p91 = scmp.ne.s32.totalorder %s86, %s88
      %p92 = scmp.eq.s32.totalorder %s12, 0
      %p93 = por %p91, %p92
      %p94 = scmp.ne.s32.totalorder %s86, %s88
      %p95 = scmp.eq.s32.totalorder %s17, 8
      %p96 = por %p94, %p95
      %p97 = scmp.ne.s32.totalorder %s88, %s89
      %p98 = scmp.eq.s32.totalorder %s17, 0
      %p99 = por %p97, %p98
      %p100 = scmp.ne.s32.totalorder %s88, %s89
      %p101 = scmp.eq.s32.totalorder %s18, 8
      %p102 = por %p100, %p101
      %p104 = scmp.ne.s32.totalorder %s89, %s103
      %p105 = scmp.eq.s32.totalorder %s18, 0
      %p106 = por %p104, %p105
      %s107 = ssub.s32 %s19, %s31
      %p108 = scmp.eq.s32.totalorder %s107, 0
      %s110 = sadd.s32 %s109, 1
      %s111 = scalar_select %p108, %s109, %s110
      %p114 = pneg %p108
      %p115 = scmp.eq.s32.totalorder %s12, 8
      %p116 = por %p114, %p115
      %p117 = scmp.ne.s32.totalorder %s109, %s112
      %p118 = scmp.eq.s32.totalorder %s12, 0
      %p119 = por %p117, %p118
      %p120 = scmp.ne.s32.totalorder %s109, %s112
      %p121 = scmp.eq.s32.totalorder %s17, 8
      %p122 = por %p120, %p121
      %p123 = scmp.ne.s32.totalorder %s112, %s113
      %p124 = scmp.eq.s32.totalorder %s17, 0
      %p125 = por %p123, %p124
      %p126 = scmp.ne.s32.totalorder %s112, %s113
      %p127 = scmp.eq.s32.totalorder %s18, 8
      %p128 = por %p126, %p127
      %p130 = scmp.ne.s32.totalorder %s113, %s129
      %p131 = scmp.eq.s32.totalorder %s18, 0
      %p132 = por %p130, %p131
      %s134 = sadd.s32 %s133, 1
      %p137 = scmp.eq.s32.totalorder %s12, 8
      %p138 = scmp.ne.s32.totalorder %s133, %s135
      %p139 = scmp.eq.s32.totalorder %s12, 0
      %p140 = por %p138, %p139
      %p141 = scmp.ne.s32.totalorder %s133, %s135
      %p142 = scmp.eq.s32.totalorder %s17, 8
      %p143 = por %p141, %p142
      %p144 = scmp.ne.s32.totalorder %s135, %s136
      %p145 = scmp.eq.s32.totalorder %s17, 0
      %p146 = por %p144, %p145
      %p147 = scmp.ne.s32.totalorder %s135, %s136
      %p148 = scmp.eq.s32.totalorder %s18, 8
      %p149 = por %p147, %p148
      %p151 = scmp.ne.s32.totalorder %s136, %s150
      %p152 = scmp.eq.s32.totalorder %s18, 0
      %p153 = por %p151, %p152
      %s155 = sadd.s32 %s154, 1
      %p158 = scmp.eq.s32.totalorder %s12, 8
      %p159 = scmp.ne.s32.totalorder %s154, %s156
      %p160 = scmp.eq.s32.totalorder %s12, 0
      %p161 = por %p159, %p160
      %p162 = scmp.ne.s32.totalorder %s154, %s156
      %p163 = scmp.eq.s32.totalorder %s17, 8
      %p164 = por %p162, %p163
      %p165 = scmp.ne.s32.totalorder %s156, %s157
      %p166 = scmp.eq.s32.totalorder %s17, 0
      %p167 = por %p165, %p166
      %p168 = scmp.ne.s32.totalorder %s156, %s157
      %p169 = scmp.eq.s32.totalorder %s18, 8
      %p170 = por %p168, %p169
      %p172 = scmp.ne.s32.totalorder %s157, %s171
      %p173 = scmp.eq.s32.totalorder %s18, 0
      %p174 = por %p172, %p173
      %s175 = ssub.s32 %s19, %s31
      %p176 = scmp.eq.s32.totalorder %s175, 0
      %s178 = sadd.s32 %s177, 1
      %s179 = scalar_select %p176, %s177, %s178
      %p182 = pneg %p176
      %p183 = scmp.eq.s32.totalorder %s12, 8
      %p184 = por %p182, %p183
      %p185 = scmp.ne.s32.totalorder %s177, %s180
      %p186 = scmp.eq.s32.totalorder %s12, 0
      %p187 = por %p185, %p186
      %p188 = scmp.ne.s32.totalorder %s177, %s180
      %p189 = scmp.eq.s32.totalorder %s17, 8
      %p190 = por %p188, %p189
      %p191 = scmp.ne.s32.totalorder %s180, %s181
      %p192 = scmp.eq.s32.totalorder %s17, 0
      %p193 = por %p191, %p192
      %p194 = scmp.ne.s32.totalorder %s180, %s181
      %p195 = scmp.eq.s32.totalorder %s18, 8
      %p196 = por %p194, %p195
      %p198 = scmp.ne.s32.totalorder %s181, %s197
      %p199 = scmp.eq.s32.totalorder %s18, 0
      %p200 = por %p198, %p199
      %p201 = scmp.le.s32.totalorder 1, %s12
      %p202 = scmp.lt.s32.totalorder %s12, 10
      %p203 = pnand %p201, %p202
      %p204 = pneg %p203
      // Predicated region
      $region9: #{gnn_encoder.2} parent=5 // pred_check
        _
      $region10: #{gnn_encoder.2} parent=5 // pred_check_branch
        %206 = sbr.rel (%p203) target = $region12
      $region11: #{gnn_encoder.2} parent=5 // pred_region
        %s207 = ssub.s32 %s12, 1
        // Predicated region
        $region13: #{gnn_encoder.2} parent=11 // pred_check
          %p208 = pneg %p99
        $region14: #{gnn_encoder.2} parent=11 // pred_check_branch
          %210 = sbr.rel (%p208) target = $region16
        $region15: #{gnn_encoder.2} parent=11 // pred_region
          _
        $region16: #{gnn_encoder.2} parent=11 // pred_fallthru
          _
        // Predicated region
        $region17: #{gnn_encoder.2} parent=11 // pred_check
          %p211 = pneg %p146
        $region18: #{gnn_encoder.2} parent=11 // pred_check_branch
          %213 = sbr.rel (%p211) target = $region20
        $region19: #{gnn_encoder.2} parent=11 // pred_region
          _
        $region20: #{gnn_encoder.2} parent=11 // pred_fallthru
          _
        // Predicated region
        $region21: #{gnn_encoder.2} parent=11 // pred_check
          %p214 = pneg %p167
        $region22: #{gnn_encoder.2} parent=11 // pred_check_branch
          %216 = sbr.rel (%p214) target = $region24
        $region23: #{gnn_encoder.2} parent=11 // pred_region
          _
        $region24: #{gnn_encoder.2} parent=11 // pred_fallthru
          _
      $region12: #{gnn_encoder.2} parent=5 // pred_fallthru
        _
      %p217 = scmp.lt.s32.totalorder %s12, 9
      // Predicated region
      $region25: #{gnn_encoder.2} parent=5 // pred_check
        %p218 = pneg %p217
      $region26: #{gnn_encoder.2} parent=5 // pred_check_branch
        %220 = sbr.rel (%p218) target = $region28
      $region27: #{gnn_encoder.2} parent=5 // pred_region
        // Predicated region
        $region29: #{gnn_encoder.2} parent=27 // pred_check
          %p221 = pneg %p46
        $region30: #{gnn_encoder.2} parent=27 // pred_check_branch
          %223 = sbr.rel (%p221) target = $region32
        $region31: #{gnn_encoder.2} parent=27 // pred_region
          %s224 = sand.u32 %s36, 1
          %s225 = sand.u32 %s36, 1
          %s226 = smul.addr %s225, 32
          %s227 = scalar_lea.vmem [#allocation3], %s226
          %s228 = smul.u32 4, %s19
          %s229 = smul.addr %s228, 3
          %s230 = sadd.s32 %s20, %s229
          %s231 = smul.addr %s230, 8
          %s232 = scalar_lea.vmem %s0, %s231
          // Predicated region
          $region33: #{gnn_encoder.2} parent=31 // pred_check
            _
          $region34: #{gnn_encoder.2} parent=31 // pred_check_branch
            %234 = sbr.rel (0) target = $region36
          $region35: #{gnn_encoder.2} parent=31 // pred_region
            // Predicated region
            $region37: #{gnn_encoder.2} parent=35 // pred_check
              _
            $region38: #{gnn_encoder.2} parent=35 // pred_check_branch
              %236 = sbr.rel (0) target = $region40
            $region39: #{gnn_encoder.2} parent=35 // pred_region
              // Predicated region
              $region52: #{gnn_encoder.2} parent=39 // pred_check
                _
              $region53: #{gnn_encoder.2} parent=39 // pred_check_branch
                %258 = sbr.rel (0) target = $region55
              $region54: #{gnn_encoder.2} parent=39 // pred_region
                loop: start=0, step=1, limit=1
                $region56: #{gnn_encoder.2} parent=54 // loop_pre_header
                  _
                $region57: #{gnn_encoder.2} parent=54 // loop_header
                  %s260 = sphi 0, %s264
                  %p261 = scmp.ge.s32.totalorder %s260, 1
                  %s265 = sphi %s232, %s232
                  %s266 = sphi %s227, %s227
                $region58: #{gnn_encoder.2} parent=54 // loop_header_branch
                  %263 = sbr.rel (%p261) target = $region62
                $region59: #{gnn_encoder.2} parent=54 // loop_body
                  %v267 = vld [vmem:[%s265] sm:$0xff]
                  %268 = vst [vmem:[%s266] sm:$0xff] %v267
                  %v269 = vld [vmem:[%s265 + $0x18] sm:$0xff]
                  %270 = vst [vmem:[%s266 + $0x8] sm:$0xff] %v269
                  %v271 = vld [vmem:[%s265 + $0x30] sm:$0xff]
                  %272 = vst [vmem:[%s266 + $0x10] sm:$0xff] %v271
                  %v273 = vld [vmem:[%s265 + $0x48] sm:$0xff]
                  %274 = vst [vmem:[%s266 + $0x18] sm:$0xff] %v273
                $region60: #{gnn_encoder.2} parent=54 // loop_footer
                  %s264 = sadd.s32 1, %s260
                $region61: #{gnn_encoder.2} parent=54 // loop_footer_branch
                  %259 = sbr.rel target = $region57
                $region62: #{gnn_encoder.2} parent=54 // loop_exit
                  _
              $region55: #{gnn_encoder.2} parent=39 // pred_fallthru
                _
              // Predicated region
              $region63: #{gnn_encoder.2} parent=39 // pred_check
                _
              $region64: #{gnn_encoder.2} parent=39 // pred_check_branch
                %276 = sbr.rel target = $region66
              $region65: #{gnn_encoder.2} parent=39 // pred_region
                _
              $region66: #{gnn_encoder.2} parent=39 // pred_fallthru
                _
            $region40: #{gnn_encoder.2} parent=35 // pred_fallthru
              _
            // Predicated region
            $region41: #{gnn_encoder.2} parent=35 // pred_check
              _
            $region42: #{gnn_encoder.2} parent=35 // pred_check_branch
              %238 = sbr.rel target = $region44
            $region43: #{gnn_encoder.2} parent=35 // pred_region
              %s240 = ssub.s32 256, 1
              loop: start=0, step=1, limit=1
              $region45: #{gnn_encoder.2} parent=43 // loop_pre_header
                _
              $region46: #{gnn_encoder.2} parent=43 // loop_header
                %s242 = sphi 0, %s246
                %p243 = scmp.ge.s32.totalorder %s242, 1
                %s247 = sphi %s232, %s232
                %s248 = sphi %s227, %s227
              $region47: #{gnn_encoder.2} parent=43 // loop_header_branch
                %245 = sbr.rel (%p243) target = $region51
              $region48: #{gnn_encoder.2} parent=43 // loop_body
                %v249 = vld [vmem:[%s247] sm:%s240]
                %250 = vst [vmem:[%s248] sm:%s240] %v249
                %v251 = vld [vmem:[%s247 + $0x18] sm:%s240]
                %252 = vst [vmem:[%s248 + $0x8] sm:%s240] %v251
                %v253 = vld [vmem:[%s247 + $0x30] sm:%s240]
                %254 = vst [vmem:[%s248 + $0x10] sm:%s240] %v253
                %v255 = vld [vmem:[%s247 + $0x48] sm:%s240]
                %256 = vst [vmem:[%s248 + $0x18] sm:%s240] %v255
              $region49: #{gnn_encoder.2} parent=43 // loop_footer
                %s246 = sadd.s32 1, %s242
              $region50: #{gnn_encoder.2} parent=43 // loop_footer_branch
                %241 = sbr.rel target = $region46
              $region51: #{gnn_encoder.2} parent=43 // loop_exit
                _
            $region44: #{gnn_encoder.2} parent=35 // pred_fallthru
              _
          $region36: #{gnn_encoder.2} parent=31 // pred_fallthru
            _
          %277 = vnop
        $region32: #{gnn_encoder.2} parent=27 // pred_fallthru
          _
        // Predicated region
        $region67: #{gnn_encoder.2} parent=27 // pred_check
          %p278 = pneg %p72
        $region68: #{gnn_encoder.2} parent=27 // pred_check_branch
          %280 = sbr.rel (%p278) target = $region70
        $region69: #{gnn_encoder.2} parent=27 // pred_region
          %s281 = smul.u32 16, %s19
          %p282 = scmp.lt.s32.totalorder %s281, 47
          %s283 = scalar_select %p282, %s281, 47
          %s284 = smul.addr %s283, 8
          %s285 = scalar_lea.vmem %s1, %s284
          %s286 = smul.u32 16, %s19
        $region70: #{gnn_encoder.2} parent=27 // pred_fallthru
          _
        // Predicated region
        $region71: #{gnn_encoder.2} parent=27 // pred_check
          %p287 = pneg %p119
        $region72: #{gnn_encoder.2} parent=27 // pred_check_branch
          %289 = sbr.rel (%p287) target = $region74
        $region73: #{gnn_encoder.2} parent=27 // pred_region
          %s290 = smul.u32 16, %s19
          %p291 = scmp.lt.s32.totalorder %s290, 47
          %s292 = scalar_select %p291, %s290, 47
          %s293 = smul.addr %s292, 4
          %s294 = scalar_lea.vmem %s3, %s293
          %s295 = smul.u32 16, %s19
        $region74: #{gnn_encoder.2} parent=27 // pred_fallthru
          _
      $region28: #{gnn_encoder.2} parent=5 // pred_fallthru
        _
      %p296 = scmp.le.s32.totalorder 1, %s12
      %p297 = scmp.lt.s32.totalorder %s12, 10
      %p298 = pnand %p296, %p297
      %p299 = pneg %p298
      // Predicated region
      $region75: #{gnn_encoder.2} parent=5 // pred_check
        _
      $region76: #{gnn_encoder.2} parent=5 // pred_check_branch
        %301 = sbr.rel (%p298) target = $region78
      $region77: #{gnn_encoder.2} parent=5 // pred_region
        %s302 = ssub.s32 %s12, 1
        %s303 = sand.u32 %s39, 1
        %s304 = sand.u32 %s39, 1
        %s305 = smul.addr %s304, 32
        %s306 = scalar_lea.vmem [#allocation3], %s305
        // Predicated region
        $region79: #{gnn_encoder.2} parent=77 // pred_check
          %p307 = pneg %p52
        $region80: #{gnn_encoder.2} parent=77 // pred_check_branch
          %309 = sbr.rel (%p307) target = $region82
        $region81: #{gnn_encoder.2} parent=77 // pred_region
          _
        $region82: #{gnn_encoder.2} parent=77 // pred_fallthru
          _
        %s310 = sand.u32 %s39, 1
        %s311 = sand.u32 %s39, 1
        %s312 = smul.addr %s311, 32
        %s313 = scalar_lea.vmem [#allocation3], %s312
        %p314 = pneg %p52
        %p315 = pneg %p49
        %s316 = smul.u32 16, %s21
        %p317 = scmp.lt.s32.totalorder %s316, 47
        %s318 = scalar_select %p317, %s316, 47
        %s319 = smul.addr %s318, 8
        %s320 = scalar_lea.vmem %s1, %s319
        %p321 = pneg %p78
        %p322 = pneg %p75
        %p323 = pneg %p99
        %p324 = pneg %p96
        %s325 = smul.u32 16, %s21
        %p326 = scmp.lt.s32.totalorder %s325, 47
        %s327 = scalar_select %p326, %s325, 47
        %s328 = smul.addr %s327, 4
        %s329 = scalar_lea.vmem %s3, %s328
        %p330 = pneg %p125
        %p331 = pneg %p122
        %p332 = pneg %p146
        %p333 = pneg %p143
        %p334 = pneg %p167
        %p335 = pneg %p164
        %p336 = pneg %p193
        %p337 = pneg %p190
        %s338 = smul.u32 16, %s21
        %p339 = scmp.lt.s32.totalorder %s338, 47
        %s340 = scalar_select %p339, %s338, 47
        %s341 = smul.addr %s340, 4
        %s342 = scalar_lea.vmem %s6, %s341
        %s343 = smul.u32 4, %s21
        %s344 = smul.u32 16, %s21
        %p345 = scmp.lt.s32.totalorder %s344, 47
        %s346 = scalar_select %p345, %s344, 47
        %s347 = smul.addr %s346, 8
        %s348 = scalar_lea.vmem %s1, %s347
        %s349 = smul.u32 16, %s21
        %s350 = smul.u32 16, %s21
        %p351 = scmp.lt.s32.totalorder %s350, 47
        %s352 = scalar_select %p351, %s350, 47
        %s353 = smul.addr %s352, 4
        %s354 = scalar_lea.vmem %s3, %s353
        %s355 = smul.u32 16, %s21
        %s356 = smul.u32 16, %s21
        %p357 = scmp.lt.s32.totalorder %s356, 47
        %s358 = scalar_select %p357, %s356, 47
        %s359 = smul.addr %s358, 4
        %s360 = scalar_lea.vmem %s6, %s359
        %s361 = smul.u32 16, %s21
        %p362 = scmp.eq.s32.totalorder %s22, 0
        // Predicated region
        $region83: #{gnn_encoder.2} parent=77 // pred_check
          %p363 = pneg %p362
        $region84: #{gnn_encoder.2} parent=77 // pred_check_branch
          %365 = sbr.rel (%p363) target = $region86
        $region85: #{gnn_encoder.2} parent=77 // pred_region
          %366 = vst [vmem:[#allocation2] sm:$0xff] 0.0
          %367 = vst [vmem:[#allocation2 + $0x8] sm:$0xff] 0.0
          %368 = vst [vmem:[#allocation2 + $0x10] sm:$0xff] 0.0
          %369 = vst [vmem:[#allocation2 + $0x18] sm:$0xff] 0.0
          %370 = vst [vmem:[#allocation2 + $0x20] sm:$0xff] 0.0
          %371 = vst [vmem:[#allocation2 + $0x28] sm:$0xff] 0.0
          %372 = vst [vmem:[#allocation2 + $0x30] sm:$0xff] 0.0
          %373 = vst [vmem:[#allocation2 + $0x38] sm:$0xff] 0.0
          %374 = vst [vmem:[#allocation2 + $0x40] sm:$0xff] 0.0
          %375 = vst [vmem:[#allocation2 + $0x48] sm:$0xff] 0.0
          %376 = vst [vmem:[#allocation2 + $0x50] sm:$0xff] 0.0
          %377 = vst [vmem:[#allocation2 + $0x58] sm:$0xff] 0.0
          %378 = vst [vmem:[#allocation2 + $0x60] sm:$0xff] 0.0
          %379 = vst [vmem:[#allocation2 + $0x68] sm:$0xff] 0.0
          %380 = vst [vmem:[#allocation2 + $0x70] sm:$0xff] 0.0
          %381 = vst [vmem:[#allocation2 + $0x78] sm:$0xff] 0.0
        $region86: #{gnn_encoder.2} parent=77 // pred_fallthru
          _
        %v382 = vld [vmem:[%s306] sm:$0xff]
        %v383 = vld [vmem:[%s306 + $0x8] sm:$0xff]
        %v384 = vld [vmem:[%s306 + $0x10] sm:$0xff]
        %v385 = vld [vmem:[%s306 + $0x18] sm:$0xff]
        %v386 = vunpack.c.0.s8 %v382
        %v387 = vunpack.c.1.s8 %v382
        %v388 = vunpack.c.2.s8 %v382
        %v389 = vunpack.c.3.s8 %v382
        %v390 = vunpack.c.0.s8 %v383
        %v391 = vunpack.c.1.s8 %v383
        %v392 = vunpack.c.2.s8 %v383
        %v393 = vunpack.c.3.s8 %v383
        %v394 = vunpack.c.0.s8 %v384
        %v395 = vunpack.c.1.s8 %v384
        %v396 = vunpack.c.2.s8 %v384
        %v397 = vunpack.c.3.s8 %v384
        %v398 = vunpack.c.0.s8 %v385
        %v399 = vunpack.c.1.s8 %v385
        %v400 = vunpack.c.2.s8 %v385
        %v401 = vunpack.c.3.s8 %v385
        %v402 = vcvt.s32.f32 %v386
        %v403 = vcvt.s32.f32 %v387
        %v404 = vcvt.s32.f32 %v388
        %v405 = vcvt.s32.f32 %v389
        %v406 = vcvt.s32.f32 %v390
        %v407 = vcvt.s32.f32 %v391
        %v408 = vcvt.s32.f32 %v392
        %v409 = vcvt.s32.f32 %v393
        %v410 = vcvt.s32.f32 %v394
        %v411 = vcvt.s32.f32 %v395
        %v412 = vcvt.s32.f32 %v396
        %v413 = vcvt.s32.f32 %v397
        %v414 = vcvt.s32.f32 %v398
        %v415 = vcvt.s32.f32 %v399
        %v416 = vcvt.s32.f32 %v400
        %v417 = vcvt.s32.f32 %v401
        %v418 = vpack.c.bf16 %v403, %v402
        %v419 = vpack.c.bf16 %v405, %v404
        %v420 = vpack.c.bf16 %v407, %v406
        %v421 = vpack.c.bf16 %v409, %v408
        %v422 = vpack.c.bf16 %v411, %v410
        %v423 = vpack.c.bf16 %v413, %v412
        %v424 = vpack.c.bf16 %v415, %v414
        %v425 = vpack.c.bf16 %v417, %v416
        %s426 = smul.u32 %s22, 128
        %s427 = sshra.s32 %s426, 3
        %s428 = sand.u32 %s426, 7
        %s429 = smul.addr %s427, 4
        %s430 = scalar_lea.vmem %s2, %s429
        %v431 = vld [vmem:[%s430] sm:$0xf]
        %v432 = vld [vmem:[%s430 + $0x4] sm:$0xf]
        %v433 = vld [vmem:[%s430 + $0x8] sm:$0xf]
        %v434 = vld [vmem:[%s430 + $0xc] sm:$0xf]
        %v435 = vld [vmem:[%s430 + $0x10] sm:$0xf]
        %v436 = vld [vmem:[%s430 + $0x14] sm:$0xf]
        %v437 = vld [vmem:[%s430 + $0x18] sm:$0xf]
        %v438 = vld [vmem:[%s430 + $0x1c] sm:$0xf]
        %v439 = vld [vmem:[%s430 + $0x20] sm:$0xf]
        %v440 = vld [vmem:[%s430 + $0x24] sm:$0xf]
        %v441 = vld [vmem:[%s430 + $0x28] sm:$0xf]
        %v442 = vld [vmem:[%s430 + $0x2c] sm:$0xf]
        %v443 = vld [vmem:[%s430 + $0x30] sm:$0xf]
        %v444 = vld [vmem:[%s430 + $0x34] sm:$0xf]
        %v445 = vld [vmem:[%s430 + $0x38] sm:$0xf]
        %v446 = vld [vmem:[%s430 + $0x3c] sm:$0xf]
        %v447 = vld [vmem:[#allocation2] sm:$0xff]
        %v448 = vld [vmem:[#allocation2 + $0x8] sm:$0xff]
        %v449 = vld [vmem:[#allocation2 + $0x10] sm:$0xff]
        %v450 = vld [vmem:[#allocation2 + $0x18] sm:$0xff]
        %v451 = vld [vmem:[#allocation2 + $0x20] sm:$0xff]
        %v452 = vld [vmem:[#allocation2 + $0x28] sm:$0xff]
        %v453 = vld [vmem:[#allocation2 + $0x30] sm:$0xff]
        %v454 = vld [vmem:[#allocation2 + $0x38] sm:$0xff]
        %v455 = vld [vmem:[#allocation2 + $0x40] sm:$0xff]
        %v456 = vld [vmem:[#allocation2 + $0x48] sm:$0xff]
        %v457 = vld [vmem:[#allocation2 + $0x50] sm:$0xff]
        %v458 = vld [vmem:[#allocation2 + $0x58] sm:$0xff]
        %v459 = vld [vmem:[#allocation2 + $0x60] sm:$0xff]
        %v460 = vld [vmem:[#allocation2 + $0x68] sm:$0xff]
        %v461 = vld [vmem:[#allocation2 + $0x70] sm:$0xff]
        %v462 = vld [vmem:[#allocation2 + $0x78] sm:$0xff]
        %v479 = vunpack.c.l.b16 %v431
        %v480 = vunpack.c.l.b16 %v432
        %v481 = vunpack.c.l.b16 %v433
        %v482 = vunpack.c.l.b16 %v434
        %v483 = vunpack.c.l.b16 %v435
        %v484 = vunpack.c.l.b16 %v436
        %v485 = vunpack.c.l.b16 %v437
        %v486 = vunpack.c.l.b16 %v438
        %v487 = vunpack.c.l.b16 %v439
        %v488 = vunpack.c.l.b16 %v440
        %v489 = vunpack.c.l.b16 %v441
        %v490 = vunpack.c.l.b16 %v442
        %v491 = vunpack.c.l.b16 %v443
        %v492 = vunpack.c.l.b16 %v444
        %v493 = vunpack.c.l.b16 %v445
        %v494 = vunpack.c.l.b16 %v446
        %v495 = vpack.c.b16 %v480, %v479
        %v496 = vpack.c.b16 %v482, %v481
        %v497 = vpack.c.b16 %v484, %v483
        %v498 = vpack.c.b16 %v486, %v485
        %v499 = vpack.c.b16 %v488, %v487
        %v500 = vpack.c.b16 %v490, %v489
        %v501 = vpack.c.b16 %v492, %v491
        %v502 = vpack.c.b16 %v494, %v493
        %511 = vmatpush.bf16.msra.mxu0 %v502
        %512 = vmatpush.bf16.msra.mxu0 %v501
        %513 = vmatpush.bf16.msra.mxu0 %v500
        %514 = vmatpush.bf16.msra.mxu0 %v499
        %515 = vmatpush.bf16.msra.mxu0 %v498
        %516 = vmatpush.bf16.msra.mxu0 %v497
        %517 = vmatpush.bf16.msra.mxu0 %v496
        %518 = vmatpush.bf16.msra.mxu0 %v495
        %519 = vmatmul.bf16.gmra.mxu0 %v418
        %v520 = vpop.f32.mrf.mxu0
        %v521 = vadd.f32 0.0, %v520
        %v522 = vpop.f32.mrf.mxu0
        %v523 = vadd.f32 0.0, %v522
        %524 = vmatmul.bf16.gmra.mxu0 %v419
        %v525 = vpop.f32.mrf.mxu0
        %v526 = vadd.f32 0.0, %v525
        %v527 = vpop.f32.mrf.mxu0
        %v528 = vadd.f32 0.0, %v527
        %529 = vmatmul.bf16.gmra.mxu0 %v420
        %v530 = vpop.f32.mrf.mxu0
        %v531 = vadd.f32 0.0, %v530
        %v532 = vpop.f32.mrf.mxu0
        %v533 = vadd.f32 0.0, %v532
        %534 = vmatmul.bf16.gmra.mxu0 %v421
        %v535 = vpop.f32.mrf.mxu0
        %v536 = vadd.f32 0.0, %v535
        %v537 = vpop.f32.mrf.mxu0
        %v538 = vadd.f32 0.0, %v537
        %539 = vmatmul.bf16.gmra.mxu0 %v422
        %v540 = vpop.f32.mrf.mxu0
        %v541 = vadd.f32 0.0, %v540
        %v542 = vpop.f32.mrf.mxu0
        %v543 = vadd.f32 0.0, %v542
        %544 = vmatmul.bf16.gmra.mxu0 %v423
        %v545 = vpop.f32.mrf.mxu0
        %v546 = vadd.f32 0.0, %v545
        %v547 = vpop.f32.mrf.mxu0
        %v548 = vadd.f32 0.0, %v547
        %549 = vmatmul.bf16.gmra.mxu0 %v424
        %v550 = vpop.f32.mrf.mxu0
        %v551 = vadd.f32 0.0, %v550
        %v552 = vpop.f32.mrf.mxu0
        %v553 = vadd.f32 0.0, %v552
        %554 = vmatmul.bf16.gmra.mxu0 %v425
        %v555 = vpop.f32.mrf.mxu0
        %v556 = vadd.f32 0.0, %v555
        %v557 = vpop.f32.mrf.mxu0
        %v558 = vadd.f32 0.0, %v557
        %559 = vdwg.mxu0
        %v560 = vadd.f32 %v447, %v521
        %v561 = vadd.f32 %v448, %v523
        %v562 = vadd.f32 %v449, %v526
        %v563 = vadd.f32 %v450, %v528
        %v564 = vadd.f32 %v451, %v531
        %v565 = vadd.f32 %v452, %v533
        %v566 = vadd.f32 %v453, %v536
        %v567 = vadd.f32 %v454, %v538
        %v568 = vadd.f32 %v455, %v541
        %v569 = vadd.f32 %v456, %v543
        %v570 = vadd.f32 %v457, %v546
        %v571 = vadd.f32 %v458, %v548
        %v572 = vadd.f32 %v459, %v551
        %v573 = vadd.f32 %v460, %v553
        %v574 = vadd.f32 %v461, %v556
        %v575 = vadd.f32 %v462, %v558
        %576 = vst [vmem:[#allocation2] sm:$0xff] %v560
        %577 = vst [vmem:[#allocation2 + $0x8] sm:$0xff] %v561
        %578 = vst [vmem:[#allocation2 + $0x10] sm:$0xff] %v562
        %579 = vst [vmem:[#allocation2 + $0x18] sm:$0xff] %v563
        %580 = vst [vmem:[#allocation2 + $0x20] sm:$0xff] %v564
        %581 = vst [vmem:[#allocation2 + $0x28] sm:$0xff] %v565
        %582 = vst [vmem:[#allocation2 + $0x30] sm:$0xff] %v566
        %583 = vst [vmem:[#allocation2 + $0x38] sm:$0xff] %v567
        %584 = vst [vmem:[#allocation2 + $0x40] sm:$0xff] %v568
        %585 = vst [vmem:[#allocation2 + $0x48] sm:$0xff] %v569
        %586 = vst [vmem:[#allocation2 + $0x50] sm:$0xff] %v570
        %587 = vst [vmem:[#allocation2 + $0x58] sm:$0xff] %v571
        %588 = vst [vmem:[#allocation2 + $0x60] sm:$0xff] %v572
        %589 = vst [vmem:[#allocation2 + $0x68] sm:$0xff] %v573
        %590 = vst [vmem:[#allocation2 + $0x70] sm:$0xff] %v574
        %591 = vst [vmem:[#allocation2 + $0x78] sm:$0xff] %v575
        %p592 = scmp.eq.s32.totalorder %s22, 2
        // Predicated region
        $region87: #{gnn_encoder.2} parent=77 // pred_check
          %p593 = pneg %p592
        $region88: #{gnn_encoder.2} parent=77 // pred_check_branch
          %595 = sbr.rel (%p593) target = $region90
        $region89: #{gnn_encoder.2} parent=77 // pred_region
          %v596 = vld [vmem:[#allocation2] sm:$0xff]
          %v597 = vld [vmem:[#allocation2 + $0x8] sm:$0xff]
          %v598 = vld [vmem:[#allocation2 + $0x10] sm:$0xff]
          %v599 = vld [vmem:[#allocation2 + $0x18] sm:$0xff]
          %v600 = vld [vmem:[#allocation2 + $0x20] sm:$0xff]
          %v601 = vld [vmem:[#allocation2 + $0x28] sm:$0xff]
          %v602 = vld [vmem:[#allocation2 + $0x30] sm:$0xff]
          %v603 = vld [vmem:[#allocation2 + $0x38] sm:$0xff]
          %v604 = vld [vmem:[#allocation2 + $0x40] sm:$0xff]
          %v605 = vld [vmem:[#allocation2 + $0x48] sm:$0xff]
          %v606 = vld [vmem:[#allocation2 + $0x50] sm:$0xff]
          %v607 = vld [vmem:[#allocation2 + $0x58] sm:$0xff]
          %v608 = vld [vmem:[#allocation2 + $0x60] sm:$0xff]
          %v609 = vld [vmem:[#allocation2 + $0x68] sm:$0xff]
          %v610 = vld [vmem:[#allocation2 + $0x70] sm:$0xff]
          %v611 = vld [vmem:[#allocation2 + $0x78] sm:$0xff]
          %v612 = vld [vmem:[%s348] sm:$0xff]
          %v613 = vld [vmem:[%s348 + $0x8] sm:$0xff]
          %v614 = vld [vmem:[%s348 + $0x10] sm:$0xff]
          %v615 = vld [vmem:[%s348 + $0x18] sm:$0xff]
          %v616 = vld [vmem:[%s348 + $0x20] sm:$0xff]
          %v617 = vld [vmem:[%s348 + $0x28] sm:$0xff]
          %v618 = vld [vmem:[%s348 + $0x30] sm:$0xff]
          %v619 = vld [vmem:[%s348 + $0x38] sm:$0xff]
          %v620 = vld [vmem:[%s348 + $0x40] sm:$0xff]
          %v621 = vld [vmem:[%s348 + $0x48] sm:$0xff]
          %v622 = vld [vmem:[%s348 + $0x50] sm:$0xff]
          %v623 = vld [vmem:[%s348 + $0x58] sm:$0xff]
          %v624 = vld [vmem:[%s348 + $0x60] sm:$0xff]
          %v625 = vld [vmem:[%s348 + $0x68] sm:$0xff]
          %v626 = vld [vmem:[%s348 + $0x70] sm:$0xff]
          %v627 = vld [vmem:[%s348 + $0x78] sm:$0xff]
          %629 = vset.pattern.permute.xlu0 0
          %630 = vperm.xlu0 %629, %v612
          %v631 = vpop.permute.xlu0 %630
          %634 = vset.pattern.permute.xlu0 0
          %635 = vperm.xlu0 %634, %v613
          %v636 = vpop.permute.xlu0 %635
          %639 = vset.pattern.permute.xlu0 0
          %640 = vperm.xlu0 %639, %v614
          %v641 = vpop.permute.xlu0 %640
          %644 = vset.pattern.permute.xlu0 0
          %645 = vperm.xlu0 %644, %v615
          %v646 = vpop.permute.xlu0 %645
          %649 = vset.pattern.permute.xlu0 0
          %650 = vperm.xlu0 %649, %v616
          %v651 = vpop.permute.xlu0 %650
          %654 = vset.pattern.permute.xlu0 0
          %655 = vperm.xlu0 %654, %v617
          %v656 = vpop.permute.xlu0 %655
          %659 = vset.pattern.permute.xlu0 0
          %660 = vperm.xlu0 %659, %v618
          %v661 = vpop.permute.xlu0 %660
          %664 = vset.pattern.permute.xlu0 0
          %665 = vperm.xlu0 %664, %v619
          %v666 = vpop.permute.xlu0 %665
          %669 = vset.pattern.permute.xlu0 0
          %670 = vperm.xlu0 %669, %v620
          %v671 = vpop.permute.xlu0 %670
          %674 = vset.pattern.permute.xlu0 0
          %675 = vperm.xlu0 %674, %v621
          %v676 = vpop.permute.xlu0 %675
          %679 = vset.pattern.permute.xlu0 0
          %680 = vperm.xlu0 %679, %v622
          %v681 = vpop.permute.xlu0 %680
          %684 = vset.pattern.permute.xlu0 0
          %685 = vperm.xlu0 %684, %v623
          %v686 = vpop.permute.xlu0 %685
          %689 = vset.pattern.permute.xlu0 0
          %690 = vperm.xlu0 %689, %v624
          %v691 = vpop.permute.xlu0 %690
          %694 = vset.pattern.permute.xlu0 0
          %695 = vperm.xlu0 %694, %v625
          %v696 = vpop.permute.xlu0 %695
          %699 = vset.pattern.permute.xlu0 0
          %700 = vperm.xlu0 %699, %v626
          %v701 = vpop.permute.xlu0 %700
          %704 = vset.pattern.permute.xlu0 0
          %705 = vperm.xlu0 %704, %v627
          %v706 = vpop.permute.xlu0 %705
          %v708 = vmul.f32 %v596, %v631
          %v709 = vmul.f32 %v597, %v636
          %v710 = vmul.f32 %v598, %v641
          %v711 = vmul.f32 %v599, %v646
          %v712 = vmul.f32 %v600, %v651
          %v713 = vmul.f32 %v601, %v656
          %v714 = vmul.f32 %v602, %v661
          %v715 = vmul.f32 %v603, %v666
          %v716 = vmul.f32 %v604, %v671
          %v717 = vmul.f32 %v605, %v676
          %v718 = vmul.f32 %v606, %v681
          %v719 = vmul.f32 %v607, %v686
          %v720 = vmul.f32 %v608, %v691
          %v721 = vmul.f32 %v609, %v696
          %v722 = vmul.f32 %v610, %v701
          %v723 = vmul.f32 %v611, %v706
          %v724 = vpack.c.bf16 %v708, %v708
          %v725 = vpack.c.bf16 %v709, %v709
          %v726 = vpack.c.bf16 %v710, %v710
          %v727 = vpack.c.bf16 %v711, %v711
          %v728 = vpack.c.bf16 %v712, %v712
          %v729 = vpack.c.bf16 %v713, %v713
          %v730 = vpack.c.bf16 %v714, %v714
          %v731 = vpack.c.bf16 %v715, %v715
          %v732 = vpack.c.bf16 %v716, %v716
          %v733 = vpack.c.bf16 %v717, %v717
          %v734 = vpack.c.bf16 %v718, %v718
          %v735 = vpack.c.bf16 %v719, %v719
          %v736 = vpack.c.bf16 %v720, %v720
          %v737 = vpack.c.bf16 %v721, %v721
          %v738 = vpack.c.bf16 %v722, %v722
          %v739 = vpack.c.bf16 %v723, %v723
          %v740 = vld [vmem:[%s354] sm:$0xf]
          %v741 = vld [vmem:[%s354 + $0x4] sm:$0xf]
          %v742 = vld [vmem:[%s354 + $0x8] sm:$0xf]
          %v743 = vld [vmem:[%s354 + $0xc] sm:$0xf]
          %v744 = vld [vmem:[%s354 + $0x10] sm:$0xf]
          %v745 = vld [vmem:[%s354 + $0x14] sm:$0xf]
          %v746 = vld [vmem:[%s354 + $0x18] sm:$0xf]
          %v747 = vld [vmem:[%s354 + $0x1c] sm:$0xf]
          %v748 = vld [vmem:[%s354 + $0x20] sm:$0xf]
          %v749 = vld [vmem:[%s354 + $0x24] sm:$0xf]
          %v750 = vld [vmem:[%s354 + $0x28] sm:$0xf]
          %v751 = vld [vmem:[%s354 + $0x2c] sm:$0xf]
          %v752 = vld [vmem:[%s354 + $0x30] sm:$0xf]
          %v753 = vld [vmem:[%s354 + $0x34] sm:$0xf]
          %v754 = vld [vmem:[%s354 + $0x38] sm:$0xf]
          %v755 = vld [vmem:[%s354 + $0x3c] sm:$0xf]
          %v772 = vunpack.c.l.b16 %v724
          %v773 = vunpack.c.l.b16 %v725
          %v774 = vunpack.c.l.b16 %v726
          %v775 = vunpack.c.l.b16 %v727
          %v776 = vunpack.c.l.b16 %v728
          %v777 = vunpack.c.l.b16 %v729
          %v778 = vunpack.c.l.b16 %v730
          %v779 = vunpack.c.l.b16 %v731
          %v780 = vunpack.c.l.b16 %v732
          %v781 = vunpack.c.l.b16 %v733
          %v782 = vunpack.c.l.b16 %v734
          %v783 = vunpack.c.l.b16 %v735
          %v784 = vunpack.c.l.b16 %v736
          %v785 = vunpack.c.l.b16 %v737
          %v786 = vunpack.c.l.b16 %v738
          %v787 = vunpack.c.l.b16 %v739
          %v788 = vpack.c.b16 %v773, %v772
          %v789 = vpack.c.b16 %v775, %v774
          %v790 = vpack.c.b16 %v777, %v776
          %v791 = vpack.c.b16 %v779, %v778
          %v792 = vpack.c.b16 %v781, %v780
          %v793 = vpack.c.b16 %v783, %v782
          %v794 = vpack.c.b16 %v785, %v784
          %v795 = vpack.c.b16 %v787, %v786
          %v820 = vunpack.c.l.b16 %v740
          %v821 = vunpack.c.l.b16 %v741
          %v822 = vunpack.c.l.b16 %v742
          %v823 = vunpack.c.l.b16 %v743
          %v824 = vunpack.c.l.b16 %v744
          %v825 = vunpack.c.l.b16 %v745
          %v826 = vunpack.c.l.b16 %v746
          %v827 = vunpack.c.l.b16 %v747
          %v828 = vunpack.c.l.b16 %v748
          %v829 = vunpack.c.l.b16 %v749
          %v830 = vunpack.c.l.b16 %v750
          %v831 = vunpack.c.l.b16 %v751
          %v832 = vunpack.c.l.b16 %v752
          %v833 = vunpack.c.l.b16 %v753
          %v834 = vunpack.c.l.b16 %v754
          %v835 = vunpack.c.l.b16 %v755
          %v836 = vpack.c.b16 %v821, %v820
          %v837 = vpack.c.b16 %v823, %v822
          %v838 = vpack.c.b16 %v825, %v824
          %v839 = vpack.c.b16 %v827, %v826
          %v840 = vpack.c.b16 %v829, %v828
          %v841 = vpack.c.b16 %v831, %v830
          %v842 = vpack.c.b16 %v833, %v832
          %v843 = vpack.c.b16 %v835, %v834
          %v852 = vld [vmem:[%s4] sm:$0xf]
          %v853 = vld [vmem:[%s4 + $0x4] sm:$0xf]
          %v854 = vld [vmem:[%s4 + $0x8] sm:$0xf]
          %v855 = vld [vmem:[%s4 + $0xc] sm:$0xf]
          %v856 = vld [vmem:[%s4 + $0x10] sm:$0xf]
          %v857 = vld [vmem:[%s4 + $0x14] sm:$0xf]
          %v858 = vld [vmem:[%s4 + $0x18] sm:$0xf]
          %v859 = vld [vmem:[%s4 + $0x1c] sm:$0xf]
          %v860 = vld [vmem:[%s4 + $0x20] sm:$0xf]
          %v861 = vld [vmem:[%s4 + $0x24] sm:$0xf]
          %v862 = vld [vmem:[%s4 + $0x28] sm:$0xf]
          %v863 = vld [vmem:[%s4 + $0x2c] sm:$0xf]
          %v864 = vld [vmem:[%s4 + $0x30] sm:$0xf]
          %v865 = vld [vmem:[%s4 + $0x34] sm:$0xf]
          %v866 = vld [vmem:[%s4 + $0x38] sm:$0xf]
          %v867 = vld [vmem:[%s4 + $0x3c] sm:$0xf]
          %v868 = vld [vmem:[%s4 + $0x40] sm:$0xf]
          %v869 = vld [vmem:[%s4 + $0x44] sm:$0xf]
          %v870 = vld [vmem:[%s4 + $0x48] sm:$0xf]
          %v871 = vld [vmem:[%s4 + $0x4c] sm:$0xf]
          %v872 = vld [vmem:[%s4 + $0x50] sm:$0xf]
          %v873 = vld [vmem:[%s4 + $0x54] sm:$0xf]
          %v874 = vld [vmem:[%s4 + $0x58] sm:$0xf]
          %v875 = vld [vmem:[%s4 + $0x5c] sm:$0xf]
          %v876 = vld [vmem:[%s4 + $0x60] sm:$0xf]
          %v877 = vld [vmem:[%s4 + $0x64] sm:$0xf]
          %v878 = vld [vmem:[%s4 + $0x68] sm:$0xf]
          %v879 = vld [vmem:[%s4 + $0x6c] sm:$0xf]
          %v880 = vld [vmem:[%s4 + $0x70] sm:$0xf]
          %v881 = vld [vmem:[%s4 + $0x74] sm:$0xf]
          %v882 = vld [vmem:[%s4 + $0x78] sm:$0xf]
          %v883 = vld [vmem:[%s4 + $0x7c] sm:$0xf]
          %v884 = vld [vmem:[%s5] sm:$0x1]
          %v886 = vperm.slane %v884, 0
          %v920 = vunpack.c.l.b16 %v852
          %v921 = vunpack.c.l.b16 %v853
          %v922 = vunpack.c.l.b16 %v854
          %v923 = vunpack.c.l.b16 %v855
          %v924 = vunpack.c.l.b16 %v856
          %v925 = vunpack.c.l.b16 %v857
          %v926 = vunpack.c.l.b16 %v858
          %v927 = vunpack.c.l.b16 %v859
          %v928 = vunpack.c.l.b16 %v860
          %v929 = vunpack.c.l.b16 %v861
          %v930 = vunpack.c.l.b16 %v862
          %v931 = vunpack.c.l.b16 %v863
          %v932 = vunpack.c.l.b16 %v864
          %v933 = vunpack.c.l.b16 %v865
          %v934 = vunpack.c.l.b16 %v866
          %v935 = vunpack.c.l.b16 %v867
          %v936 = vunpack.c.l.b16 %v868
          %v937 = vunpack.c.l.b16 %v869
          %v938 = vunpack.c.l.b16 %v870
          %v939 = vunpack.c.l.b16 %v871
          %v940 = vunpack.c.l.b16 %v872
          %v941 = vunpack.c.l.b16 %v873
          %v942 = vunpack.c.l.b16 %v874
          %v943 = vunpack.c.l.b16 %v875
          %v944 = vunpack.c.l.b16 %v876
          %v945 = vunpack.c.l.b16 %v877
          %v946 = vunpack.c.l.b16 %v878
          %v947 = vunpack.c.l.b16 %v879
          %v948 = vunpack.c.l.b16 %v880
          %v949 = vunpack.c.l.b16 %v881
          %v950 = vunpack.c.l.b16 %v882
          %v951 = vunpack.c.l.b16 %v883
          %v952 = vpack.c.b16 %v921, %v920
          %v953 = vpack.c.b16 %v923, %v922
          %v954 = vpack.c.b16 %v925, %v924
          %v955 = vpack.c.b16 %v927, %v926
          %v956 = vpack.c.b16 %v929, %v928
          %v957 = vpack.c.b16 %v931, %v930
          %v958 = vpack.c.b16 %v933, %v932
          %v959 = vpack.c.b16 %v935, %v934
          %v960 = vpack.c.b16 %v937, %v936
          %v961 = vpack.c.b16 %v939, %v938
          %v962 = vpack.c.b16 %v941, %v940
          %v963 = vpack.c.b16 %v943, %v942
          %v964 = vpack.c.b16 %v945, %v944
          %v965 = vpack.c.b16 %v947, %v946
          %v966 = vpack.c.b16 %v949, %v948
          %v967 = vpack.c.b16 %v951, %v950
          %984 = vmatpush.bf16.msra.mxu0 %v959
          %985 = vmatpush.bf16.msra.mxu0 %v958
          %986 = vmatpush.bf16.msra.mxu0 %v957
          %987 = vmatpush.bf16.msra.mxu0 %v956
          %988 = vmatpush.bf16.msra.mxu0 %v955
          %989 = vmatpush.bf16.msra.mxu0 %v954
          %990 = vmatpush.bf16.msra.mxu0 %v953
          %991 = vmatpush.bf16.msra.mxu0 %v952
          %992 = vmatmul.bf16.gmra.mxu0 %v788
          %v993 = vpop.f32.mrf.mxu0
          %v994 = vadd.f32 %v886, %v993
          %v995 = vpop.f32.mrf.mxu0
          %v996 = vadd.f32 %v886, %v995
          %997 = vmatmul.bf16.gmra.mxu0 %v789
          %v998 = vpop.f32.mrf.mxu0
          %v999 = vadd.f32 %v886, %v998
          %v1000 = vpop.f32.mrf.mxu0
          %v1001 = vadd.f32 %v886, %v1000
          %1002 = vmatmul.bf16.gmra.mxu0 %v790
          %v1003 = vpop.f32.mrf.mxu0
          %v1004 = vadd.f32 %v886, %v1003
          %v1005 = vpop.f32.mrf.mxu0
          %v1006 = vadd.f32 %v886, %v1005
          %1007 = vmatmul.bf16.gmra.mxu0 %v791
          %v1008 = vpop.f32.mrf.mxu0
          %v1009 = vadd.f32 %v886, %v1008
          %v1010 = vpop.f32.mrf.mxu0
          %v1011 = vadd.f32 %v886, %v1010
          %1012 = vmatmul.bf16.gmra.mxu0 %v792
          %v1013 = vpop.f32.mrf.mxu0
          %v1014 = vadd.f32 %v886, %v1013
          %v1015 = vpop.f32.mrf.mxu0
          %v1016 = vadd.f32 %v886, %v1015
          %1017 = vmatmul.bf16.gmra.mxu0 %v793
          %v1018 = vpop.f32.mrf.mxu0
          %v1019 = vadd.f32 %v886, %v1018
          %v1020 = vpop.f32.mrf.mxu0
          %v1021 = vadd.f32 %v886, %v1020
          %1022 = vmatmul.bf16.gmra.mxu0 %v794
          %v1023 = vpop.f32.mrf.mxu0
          %v1024 = vadd.f32 %v886, %v1023
          %v1025 = vpop.f32.mrf.mxu0
          %v1026 = vadd.f32 %v886, %v1025
          %1027 = vmatmul.bf16.gmra.mxu0 %v795
          %v1028 = vpop.f32.mrf.mxu0
          %v1029 = vadd.f32 %v886, %v1028
          %v1030 = vpop.f32.mrf.mxu0
          %v1031 = vadd.f32 %v886, %v1030
          %1032 = vdwg.mxu0
          %1033 = vmatpush.bf16.msra.mxu0 %v967
          %1034 = vmatpush.bf16.msra.mxu0 %v966
          %1035 = vmatpush.bf16.msra.mxu0 %v965
          %1036 = vmatpush.bf16.msra.mxu0 %v964
          %1037 = vmatpush.bf16.msra.mxu0 %v963
          %1038 = vmatpush.bf16.msra.mxu0 %v962
          %1039 = vmatpush.bf16.msra.mxu0 %v961
          %1040 = vmatpush.bf16.msra.mxu0 %v960
          %1041 = vmatmul.bf16.gmra.mxu0 %v836
          %v1042 = vpop.f32.mrf.mxu0
          %v1043 = vadd.f32 %v994, %v1042
          %v1044 = vpop.f32.mrf.mxu0
          %v1045 = vadd.f32 %v996, %v1044
          %1046 = vmatmul.bf16.gmra.mxu0 %v837
          %v1047 = vpop.f32.mrf.mxu0
          %v1048 = vadd.f32 %v999, %v1047
          %v1049 = vpop.f32.mrf.mxu0
          %v1050 = vadd.f32 %v1001, %v1049
          %1051 = vmatmul.bf16.gmra.mxu0 %v838
          %v1052 = vpop.f32.mrf.mxu0
          %v1053 = vadd.f32 %v1004, %v1052
          %v1054 = vpop.f32.mrf.mxu0
          %v1055 = vadd.f32 %v1006, %v1054
          %1056 = vmatmul.bf16.gmra.mxu0 %v839
          %v1057 = vpop.f32.mrf.mxu0
          %v1058 = vadd.f32 %v1009, %v1057
          %v1059 = vpop.f32.mrf.mxu0
          %v1060 = vadd.f32 %v1011, %v1059
          %1061 = vmatmul.bf16.gmra.mxu0 %v840
          %v1062 = vpop.f32.mrf.mxu0
          %v1063 = vadd.f32 %v1014, %v1062
          %v1064 = vpop.f32.mrf.mxu0
          %v1065 = vadd.f32 %v1016, %v1064
          %1066 = vmatmul.bf16.gmra.mxu0 %v841
          %v1067 = vpop.f32.mrf.mxu0
          %v1068 = vadd.f32 %v1019, %v1067
          %v1069 = vpop.f32.mrf.mxu0
          %v1070 = vadd.f32 %v1021, %v1069
          %1071 = vmatmul.bf16.gmra.mxu0 %v842
          %v1072 = vpop.f32.mrf.mxu0
          %v1073 = vadd.f32 %v1024, %v1072
          %v1074 = vpop.f32.mrf.mxu0
          %v1075 = vadd.f32 %v1026, %v1074
          %1076 = vmatmul.bf16.gmra.mxu0 %v843
          %v1077 = vpop.f32.mrf.mxu0
          %v1078 = vadd.f32 %v1029, %v1077
          %v1079 = vpop.f32.mrf.mxu0
          %v1080 = vadd.f32 %v1031, %v1079
          %1081 = vdwg.mxu0
          %v1082 = vmax.f32 %v1043, 0.0
          %v1083 = vmax.f32 %v1045, 0.0
          %v1084 = vmax.f32 %v1048, 0.0
          %v1085 = vmax.f32 %v1050, 0.0
          %v1086 = vmax.f32 %v1053, 0.0
          %v1087 = vmax.f32 %v1055, 0.0
          %v1088 = vmax.f32 %v1058, 0.0
          %v1089 = vmax.f32 %v1060, 0.0
          %v1090 = vmax.f32 %v1063, 0.0
          %v1091 = vmax.f32 %v1065, 0.0
          %v1092 = vmax.f32 %v1068, 0.0
          %v1093 = vmax.f32 %v1070, 0.0
          %v1094 = vmax.f32 %v1073, 0.0
          %v1095 = vmax.f32 %v1075, 0.0
          %v1096 = vmax.f32 %v1078, 0.0
          %v1097 = vmax.f32 %v1080, 0.0
          %v1098 = vpack.c.bf16 %v1082, %v1082
          %v1099 = vpack.c.bf16 %v1083, %v1083
          %v1100 = vpack.c.bf16 %v1084, %v1084
          %v1101 = vpack.c.bf16 %v1085, %v1085
          %v1102 = vpack.c.bf16 %v1086, %v1086
          %v1103 = vpack.c.bf16 %v1087, %v1087
          %v1104 = vpack.c.bf16 %v1088, %v1088
          %v1105 = vpack.c.bf16 %v1089, %v1089
          %v1106 = vpack.c.bf16 %v1090, %v1090
          %v1107 = vpack.c.bf16 %v1091, %v1091
          %v1108 = vpack.c.bf16 %v1092, %v1092
          %v1109 = vpack.c.bf16 %v1093, %v1093
          %v1110 = vpack.c.bf16 %v1094, %v1094
          %v1111 = vpack.c.bf16 %v1095, %v1095
          %v1112 = vpack.c.bf16 %v1096, %v1096
          %v1113 = vpack.c.bf16 %v1097, %v1097
          %1114 = vst [vmem:[%s360] sm:$0xf] %v1098
          %1115 = vst [vmem:[%s360 + $0x4] sm:$0xf] %v1099
          %1116 = vst [vmem:[%s360 + $0x8] sm:$0xf] %v1100
          %1117 = vst [vmem:[%s360 + $0xc] sm:$0xf] %v1101
          %1118 = vst [vmem:[%s360 + $0x10] sm:$0xf] %v1102
          %1119 = vst [vmem:[%s360 + $0x14] sm:$0xf] %v1103
          %1120 = vst [vmem:[%s360 + $0x18] sm:$0xf] %v1104
          %1121 = vst [vmem:[%s360 + $0x1c] sm:$0xf] %v1105
          %1122 = vst [vmem:[%s360 + $0x20] sm:$0xf] %v1106
          %1123 = vst [vmem:[%s360 + $0x24] sm:$0xf] %v1107
          %1124 = vst [vmem:[%s360 + $0x28] sm:$0xf] %v1108
          %1125 = vst [vmem:[%s360 + $0x2c] sm:$0xf] %v1109
          %1126 = vst [vmem:[%s360 + $0x30] sm:$0xf] %v1110
          %1127 = vst [vmem:[%s360 + $0x34] sm:$0xf] %v1111
          %1128 = vst [vmem:[%s360 + $0x38] sm:$0xf] %v1112
          %1129 = vst [vmem:[%s360 + $0x3c] sm:$0xf] %v1113
        $region90: #{gnn_encoder.2} parent=77 // pred_fallthru
          _
        %s1130 = smul.u32 16, %s21
        %p1131 = scmp.lt.s32.totalorder %s1130, 47
        %s1132 = scalar_select %p1131, %s1130, 47
        %s1133 = smul.addr %s1132, 4
        %s1134 = scalar_lea.vmem %s6, %s1133
        // Predicated region
        $region91: #{gnn_encoder.2} parent=77 // pred_check
          %p1135 = pneg %p190
        $region92: #{gnn_encoder.2} parent=77 // pred_check_branch
          %1137 = sbr.rel (%p1135) target = $region94
        $region93: #{gnn_encoder.2} parent=77 // pred_region
          %s1138 = smul.u32 16, %s21
        $region94: #{gnn_encoder.2} parent=77 // pred_fallthru
          _
      $region78: #{gnn_encoder.2} parent=5 // pred_fallthru
        _
      %p1139 = scmp.le.s32.totalorder 2, %s12
      // Predicated region
      $region95: #{gnn_encoder.2} parent=5 // pred_check
        %p1140 = pneg %p1139
      $region96: #{gnn_encoder.2} parent=5 // pred_check_branch
        %1142 = sbr.rel (%p1140) target = $region98
      $region97: #{gnn_encoder.2} parent=5 // pred_region
        %s1143 = ssub.s32 %s12, 2
        // Predicated region
        $region99: #{gnn_encoder.2} parent=97 // pred_check
          %p1144 = pneg %p196
        $region100: #{gnn_encoder.2} parent=97 // pred_check_branch
          %1146 = sbr.rel (%p1144) target = $region102
        $region101: #{gnn_encoder.2} parent=97 // pred_region
          %s1147 = smul.u32 16, %s23
          %p1148 = scmp.lt.s32.totalorder %s1147, 47
          %s1149 = scalar_select %p1148, %s1147, 47
          %s1150 = smul.addr %s1149, 4
          %s1151 = scalar_lea.vmem %s6, %s1150
        $region102: #{gnn_encoder.2} parent=97 // pred_fallthru
          _
      $region98: #{gnn_encoder.2} parent=5 // pred_fallthru
        _
    $region6: #{gnn_encoder.2} parent=1 // loop_footer
      %s16 = sadd.s32 1, %s12
    $region7: #{gnn_encoder.2} parent=1 // loop_footer_branch
      %11 = sbr.rel target = $region3
    $region8: #{gnn_encoder.2} parent=1 // loop_exit
      _

// kernel: gnn_encoder.3
$region0: #{gnn_encoder.3}
  #allocation0 [shape = 'u32[]', space=smem, size = 0x4, offset = 0x4, fixed_abs, tag = 'smem constant byte address 0x4 - core index']
  #allocation1 [shape = 'u32[72,128]{1,0:T(1,128)}', space=vmem, size = 0x9000, scoped, tag = 'internal scratch']
  #allocation2 [shape = 'f32[128,128]{1,0:T(8,128)}', space=vmem, size = 0x10000, scoped, tag = 'scratch operand']
  %s0 = inlined_call_operand.vmem [shape: s8[384,384], index: 0, kind: input, shape index: {}]
  %s1 = inlined_call_operand.vmem [shape: f32[384,1], index: 1, kind: input, shape index: {}]
  %s2 = inlined_call_operand.vmem [shape: bf16[384,128], index: 2, kind: input, shape index: {}, may-alias: {2,3}]
  %s3 = inlined_call_operand.vmem [shape: bf16[384,128], index: 3, kind: input, shape index: {}, may-alias: {2,3}]
  %s4 = inlined_call_operand.vmem [shape: bf16[256,128], index: 4, kind: input, shape index: {}]
  %s5 = inlined_call_operand.vmem [shape: f32[1,128], index: 5, kind: input, shape index: {}]
  %s6 = inlined_call_operand.vmem [shape: f32[384,128], index: 6, kind: output, shape index: {}]
  %s7 = sld [smem:[#allocation0]]
  $region103: #{gnn_encoder.3} parent=0
    _
  %s9 = ssub.s32 1, %s7
  %s10 = scalar_select 0, %s9, %s7
  $region1: #{gnn_encoder.3} parent=0
    #allocation3 [shape = 'u8[32768]{0}', space=vmem, size = 0x8000, scoped, tag = 'input window, operand 0']
    loop: start=0, step=1, limit=11
    $region2: #{gnn_encoder.3} parent=1 // loop_pre_header
      _
    $region3: #{gnn_encoder.3} parent=1 // loop_header
      %s12 = sphi 0, %s16
      %p13 = scmp.ge.s32.totalorder %s12, 11
      %s19 = sphi 0, %s31
      %s20 = sphi 0, %s27
      %s21 = sphi 0, %s19
      %s22 = sphi 0, %s20
      %s23 = sphi 0, %s21
      %s24 = sphi 0, %s22
      %s36 = sphi 0, %s38
      %s39 = sphi 0, %s36
      %s40 = sphi 0, %s39
      %s56 = sphi 0, %s40
      %s62 = sphi 0, %s64
      %s65 = sphi 0, %s62
      %s66 = sphi 0, %s65
      %s82 = sphi 0, %s66
      %s86 = sphi 0, %s86
      %s88 = sphi 0, %s86
      %s89 = sphi 0, %s88
      %s103 = sphi 0, %s89
      %s109 = sphi 0, %s111
      %s112 = sphi 0, %s109
      %s113 = sphi 0, %s112
      %s129 = sphi 0, %s113
      %s133 = sphi 0, %s133
      %s135 = sphi 0, %s133
      %s136 = sphi 0, %s135
      %s150 = sphi 0, %s136
      %s154 = sphi 0, %s154
      %s156 = sphi 0, %s154
      %s157 = sphi 0, %s156
      %s171 = sphi 0, %s157
      %s177 = sphi 0, %s179
      %s180 = sphi 0, %s177
      %s181 = sphi 0, %s180
      %s197 = sphi 0, %s181
    $region4: #{gnn_encoder.3} parent=1 // loop_header_branch
      %15 = sbr.rel (%p13) target = $region8
    $region5: #{gnn_encoder.3} parent=1 // loop_body
      %s17 = ssub.s32 %s12, 1
      %s18 = ssub.s32 %s12, 2
      %s25 = sadd.s32 1, %s20
      %p26 = scmp.ge.s32.totalorder %s25, 3
      %s27 = scalar_select %p26, 0, %s25
      %s28 = sadd.s32 1, %s19
      %s29 = scalar_select %p26, %s28, %s19
      %p30 = scmp.ge.s32.totalorder %s29, 3
      %s31 = scalar_select %p30, 0, %s29
      %s32 = ssub.s32 %s19, %s31
      %s33 = ssub.s32 %s20, %s27
      %s34 = sor.u32 %s32, %s33
      %p35 = scmp.eq.s32.totalorder %s34, 0
      %s37 = sadd.s32 %s36, 1
      %s38 = scalar_select %p35, %s36, %s37
      %p41 = pneg %p35
      %p42 = scmp.eq.s32.totalorder %s12, 8
      %p43 = por %p41, %p42
      %p44 = scmp.ne.s32.totalorder %s36, %s39
      %p45 = scmp.eq.s32.totalorder %s12, 0
      %p46 = por %p44, %p45
      %p47 = scmp.ne.s32.totalorder %s36, %s39
      %p48 = scmp.eq.s32.totalorder %s17, 8
      %p49 = por %p47, %p48
      %p50 = scmp.ne.s32.totalorder %s39, %s40
      %p51 = scmp.eq.s32.totalorder %s17, 0
      %p52 = por %p50, %p51
      %p53 = scmp.ne.s32.totalorder %s39, %s40
      %p54 = scmp.eq.s32.totalorder %s18, 8
      %p55 = por %p53, %p54
      %p57 = scmp.ne.s32.totalorder %s40, %s56
      %p58 = scmp.eq.s32.totalorder %s18, 0
      %p59 = por %p57, %p58
      %s60 = ssub.s32 %s19, %s31
      %p61 = scmp.eq.s32.totalorder %s60, 0
      %s63 = sadd.s32 %s62, 1
      %s64 = scalar_select %p61, %s62, %s63
      %p67 = pneg %p61
      %p68 = scmp.eq.s32.totalorder %s12, 8
      %p69 = por %p67, %p68
      %p70 = scmp.ne.s32.totalorder %s62, %s65
      %p71 = scmp.eq.s32.totalorder %s12, 0
      %p72 = por %p70, %p71
      %p73 = scmp.ne.s32.totalorder %s62, %s65
      %p74 = scmp.eq.s32.totalorder %s17, 8
      %p75 = por %p73, %p74
      %p76 = scmp.ne.s32.totalorder %s65, %s66
      %p77 = scmp.eq.s32.totalorder %s17, 0
      %p78 = por %p76, %p77
      %p79 = scmp.ne.s32.totalorder %s65, %s66
      %p80 = scmp.eq.s32.totalorder %s18, 8
      %p81 = por %p79, %p80
      %p83 = scmp.ne.s32.totalorder %s66, %s82
      %p84 = scmp.eq.s32.totalorder %s18, 0
      %p85 = por %p83, %p84
      %s87 = sadd.s32 %s86, 1
      %p90 = scmp.eq.s32.totalorder %s12, 8
      %p91 = scmp.ne.s32.totalorder %s86, %s88
      %p92 = scmp.eq.s32.totalorder %s12, 0
      %p93 = por %p91, %p92
      %p94 = scmp.ne.s32.totalorder %s86, %s88
      %p95 = scmp.eq.s32.totalorder %s17, 8
      %p96 = por %p94, %p95
      %p97 = scmp.ne.s32.totalorder %s88, %s89
      %p98 = scmp.eq.s32.totalorder %s17, 0
      %p99 = por %p97, %p98
      %p100 = scmp.ne.s32.totalorder %s88, %s89
      %p101 = scmp.eq.s32.totalorder %s18, 8
      %p102 = por %p100, %p101
      %p104 = scmp.ne.s32.totalorder %s89, %s103
      %p105 = scmp.eq.s32.totalorder %s18, 0
      %p106 = por %p104, %p105
      %s107 = ssub.s32 %s19, %s31
      %p108 = scmp.eq.s32.totalorder %s107, 0
      %s110 = sadd.s32 %s109, 1
      %s111 = scalar_select %p108, %s109, %s110
      %p114 = pneg %p108
      %p115 = scmp.eq.s32.totalorder %s12, 8
      %p116 = por %p114, %p115
      %p117 = scmp.ne.s32.totalorder %s109, %s112
      %p118 = scmp.eq.s32.totalorder %s12, 0
      %p119 = por %p117, %p118
      %p120 = scmp.ne.s32.totalorder %s109, %s112
      %p121 = scmp.eq.s32.totalorder %s17, 8
      %p122 = por %p120, %p121
      %p123 = scmp.ne.s32.totalorder %s112, %s113
      %p124 = scmp.eq.s32.totalorder %s17, 0
      %p125 = por %p123, %p124
      %p126 = scmp.ne.s32.totalorder %s112, %s113
      %p127 = scmp.eq.s32.totalorder %s18, 8
      %p128 = por %p126, %p127
      %p130 = scmp.ne.s32.totalorder %s113, %s129
      %p131 = scmp.eq.s32.totalorder %s18, 0
      %p132 = por %p130, %p131
      %s134 = sadd.s32 %s133, 1
      %p137 = scmp.eq.s32.totalorder %s12, 8
      %p138 = scmp.ne.s32.totalorder %s133, %s135
      %p139 = scmp.eq.s32.totalorder %s12, 0
      %p140 = por %p138, %p139
      %p141 = scmp.ne.s32.totalorder %s133, %s135
      %p142 = scmp.eq.s32.totalorder %s17, 8
      %p143 = por %p141, %p142
      %p144 = scmp.ne.s32.totalorder %s135, %s136
      %p145 = scmp.eq.s32.totalorder %s17, 0
      %p146 = por %p144, %p145
      %p147 = scmp.ne.s32.totalorder %s135, %s136
      %p148 = scmp.eq.s32.totalorder %s18, 8
      %p149 = por %p147, %p148
      %p151 = scmp.ne.s32.totalorder %s136, %s150
      %p152 = scmp.eq.s32.totalorder %s18, 0
      %p153 = por %p151, %p152
      %s155 = sadd.s32 %s154, 1
      %p158 = scmp.eq.s32.totalorder %s12, 8
      %p159 = scmp.ne.s32.totalorder %s154, %s156
      %p160 = scmp.eq.s32.totalorder %s12, 0
      %p161 = por %p159, %p160
      %p162 = scmp.ne.s32.totalorder %s154, %s156
      %p163 = scmp.eq.s32.totalorder %s17, 8
      %p164 = por %p162, %p163
      %p165 = scmp.ne.s32.totalorder %s156, %s157
      %p166 = scmp.eq.s32.totalorder %s17, 0
      %p167 = por %p165, %p166
      %p168 = scmp.ne.s32.totalorder %s156, %s157
      %p169 = scmp.eq.s32.totalorder %s18, 8
      %p170 = por %p168, %p169
      %p172 = scmp.ne.s32.totalorder %s157, %s171
      %p173 = scmp.eq.s32.totalorder %s18, 0
      %p174 = por %p172, %p173
      %s175 = ssub.s32 %s19, %s31
      %p176 = scmp.eq.s32.totalorder %s175, 0
      %s178 = sadd.s32 %s177, 1
      %s179 = scalar_select %p176, %s177, %s178
      %p182 = pneg %p176
      %p183 = scmp.eq.s32.totalorder %s12, 8
      %p184 = por %p182, %p183
      %p185 = scmp.ne.s32.totalorder %s177, %s180
      %p186 = scmp.eq.s32.totalorder %s12, 0
      %p187 = por %p185, %p186
      %p188 = scmp.ne.s32.totalorder %s177, %s180
      %p189 = scmp.eq.s32.totalorder %s17, 8
      %p190 = por %p188, %p189
      %p191 = scmp.ne.s32.totalorder %s180, %s181
      %p192 = scmp.eq.s32.totalorder %s17, 0
      %p193 = por %p191, %p192
      %p194 = scmp.ne.s32.totalorder %s180, %s181
      %p195 = scmp.eq.s32.totalorder %s18, 8
      %p196 = por %p194, %p195
      %p198 = scmp.ne.s32.totalorder %s181, %s197
      %p199 = scmp.eq.s32.totalorder %s18, 0
      %p200 = por %p198, %p199
      %p201 = scmp.le.s32.totalorder 1, %s12
      %p202 = scmp.lt.s32.totalorder %s12, 10
      %p203 = pnand %p201, %p202
      %p204 = pneg %p203
      // Predicated region
      $region9: #{gnn_encoder.3} parent=5 // pred_check
        _
      $region10: #{gnn_encoder.3} parent=5 // pred_check_branch
        %206 = sbr.rel (%p203) target = $region12
      $region11: #{gnn_encoder.3} parent=5 // pred_region
        %s207 = ssub.s32 %s12, 1
        // Predicated region
        $region13: #{gnn_encoder.3} parent=11 // pred_check
          %p208 = pneg %p99
        $region14: #{gnn_encoder.3} parent=11 // pred_check_branch
          %210 = sbr.rel (%p208) target = $region16
        $region15: #{gnn_encoder.3} parent=11 // pred_region
          _
        $region16: #{gnn_encoder.3} parent=11 // pred_fallthru
          _
        // Predicated region
        $region17: #{gnn_encoder.3} parent=11 // pred_check
          %p211 = pneg %p146
        $region18: #{gnn_encoder.3} parent=11 // pred_check_branch
          %213 = sbr.rel (%p211) target = $region20
        $region19: #{gnn_encoder.3} parent=11 // pred_region
          _
        $region20: #{gnn_encoder.3} parent=11 // pred_fallthru
          _
        // Predicated region
        $region21: #{gnn_encoder.3} parent=11 // pred_check
          %p214 = pneg %p167
        $region22: #{gnn_encoder.3} parent=11 // pred_check_branch
          %216 = sbr.rel (%p214) target = $region24
        $region23: #{gnn_encoder.3} parent=11 // pred_region
          _
        $region24: #{gnn_encoder.3} parent=11 // pred_fallthru
          _
      $region12: #{gnn_encoder.3} parent=5 // pred_fallthru
        _
      %p217 = scmp.lt.s32.totalorder %s12, 9
      // Predicated region
      $region25: #{gnn_encoder.3} parent=5 // pred_check
        %p218 = pneg %p217
      $region26: #{gnn_encoder.3} parent=5 // pred_check_branch
        %220 = sbr.rel (%p218) target = $region28
      $region27: #{gnn_encoder.3} parent=5 // pred_region
        // Predicated region
        $region29: #{gnn_encoder.3} parent=27 // pred_check
          %p221 = pneg %p46
        $region30: #{gnn_encoder.3} parent=27 // pred_check_branch
          %223 = sbr.rel (%p221) target = $region32
        $region31: #{gnn_encoder.3} parent=27 // pred_region
          %s224 = sand.u32 %s36, 1
          %s225 = sand.u32 %s36, 1
          %s226 = smul.addr %s225, 32
          %s227 = scalar_lea.vmem [#allocation3], %s226
          %s228 = smul.u32 4, %s19
          %s229 = smul.addr %s228, 3
          %s230 = sadd.s32 %s20, %s229
          %s231 = smul.addr %s230, 8
          %s232 = scalar_lea.vmem %s0, %s231
          // Predicated region
          $region33: #{gnn_encoder.3} parent=31 // pred_check
            _
          $region34: #{gnn_encoder.3} parent=31 // pred_check_branch
            %234 = sbr.rel (0) target = $region36
          $region35: #{gnn_encoder.3} parent=31 // pred_region
            // Predicated region
            $region37: #{gnn_encoder.3} parent=35 // pred_check
              _
            $region38: #{gnn_encoder.3} parent=35 // pred_check_branch
              %236 = sbr.rel (0) target = $region40
            $region39: #{gnn_encoder.3} parent=35 // pred_region
              // Predicated region
              $region52: #{gnn_encoder.3} parent=39 // pred_check
                _
              $region53: #{gnn_encoder.3} parent=39 // pred_check_branch
                %258 = sbr.rel (0) target = $region55
              $region54: #{gnn_encoder.3} parent=39 // pred_region
                loop: start=0, step=1, limit=1
                $region56: #{gnn_encoder.3} parent=54 // loop_pre_header
                  _
                $region57: #{gnn_encoder.3} parent=54 // loop_header
                  %s260 = sphi 0, %s264
                  %p261 = scmp.ge.s32.totalorder %s260, 1
                  %s265 = sphi %s232, %s232
                  %s266 = sphi %s227, %s227
                $region58: #{gnn_encoder.3} parent=54 // loop_header_branch
                  %263 = sbr.rel (%p261) target = $region62
                $region59: #{gnn_encoder.3} parent=54 // loop_body
                  %v267 = vld [vmem:[%s265] sm:$0xff]
                  %268 = vst [vmem:[%s266] sm:$0xff] %v267
                  %v269 = vld [vmem:[%s265 + $0x18] sm:$0xff]
                  %270 = vst [vmem:[%s266 + $0x8] sm:$0xff] %v269
                  %v271 = vld [vmem:[%s265 + $0x30] sm:$0xff]
                  %272 = vst [vmem:[%s266 + $0x10] sm:$0xff] %v271
                  %v273 = vld [vmem:[%s265 + $0x48] sm:$0xff]
                  %274 = vst [vmem:[%s266 + $0x18] sm:$0xff] %v273
                $region60: #{gnn_encoder.3} parent=54 // loop_footer
                  %s264 = sadd.s32 1, %s260
                $region61: #{gnn_encoder.3} parent=54 // loop_footer_branch
                  %259 = sbr.rel target = $region57
                $region62: #{gnn_encoder.3} parent=54 // loop_exit
                  _
              $region55: #{gnn_encoder.3} parent=39 // pred_fallthru
                _
              // Predicated region
              $region63: #{gnn_encoder.3} parent=39 // pred_check
                _
              $region64: #{gnn_encoder.3} parent=39 // pred_check_branch
                %276 = sbr.rel target = $region66
              $region65: #{gnn_encoder.3} parent=39 // pred_region
                _
              $region66: #{gnn_encoder.3} parent=39 // pred_fallthru
                _
            $region40: #{gnn_encoder.3} parent=35 // pred_fallthru
              _
            // Predicated region
            $region41: #{gnn_encoder.3} parent=35 // pred_check
              _
            $region42: #{gnn_encoder.3} parent=35 // pred_check_branch
              %238 = sbr.rel target = $region44
            $region43: #{gnn_encoder.3} parent=35 // pred_region
              %s240 = ssub.s32 256, 1
              loop: start=0, step=1, limit=1
              $region45: #{gnn_encoder.3} parent=43 // loop_pre_header
                _
              $region46: #{gnn_encoder.3} parent=43 // loop_header
                %s242 = sphi 0, %s246
                %p243 = scmp.ge.s32.totalorder %s242, 1
                %s247 = sphi %s232, %s232
                %s248 = sphi %s227, %s227
              $region47: #{gnn_encoder.3} parent=43 // loop_header_branch
                %245 = sbr.rel (%p243) target = $region51
              $region48: #{gnn_encoder.3} parent=43 // loop_body
                %v249 = vld [vmem:[%s247] sm:%s240]
                %250 = vst [vmem:[%s248] sm:%s240] %v249
                %v251 = vld [vmem:[%s247 + $0x18] sm:%s240]
                %252 = vst [vmem:[%s248 + $0x8] sm:%s240] %v251
                %v253 = vld [vmem:[%s247 + $0x30] sm:%s240]
                %254 = vst [vmem:[%s248 + $0x10] sm:%s240] %v253
                %v255 = vld [vmem:[%s247 + $0x48] sm:%s240]
                %256 = vst [vmem:[%s248 + $0x18] sm:%s240] %v255
              $region49: #{gnn_encoder.3} parent=43 // loop_footer
                %s246 = sadd.s32 1, %s242
              $region50: #{gnn_encoder.3} parent=43 // loop_footer_branch
                %241 = sbr.rel target = $region46
              $region51: #{gnn_encoder.3} parent=43 // loop_exit
                _
            $region44: #{gnn_encoder.3} parent=35 // pred_fallthru
              _
          $region36: #{gnn_encoder.3} parent=31 // pred_fallthru
            _
          %277 = vnop
        $region32: #{gnn_encoder.3} parent=27 // pred_fallthru
          _
        // Predicated region
        $region67: #{gnn_encoder.3} parent=27 // pred_check
          %p278 = pneg %p72
        $region68: #{gnn_encoder.3} parent=27 // pred_check_branch
          %280 = sbr.rel (%p278) target = $region70
        $region69: #{gnn_encoder.3} parent=27 // pred_region
          %s281 = smul.u32 16, %s19
          %p282 = scmp.lt.s32.totalorder %s281, 47
          %s283 = scalar_select %p282, %s281, 47
          %s284 = smul.addr %s283, 8
          %s285 = scalar_lea.vmem %s1, %s284
          %s286 = smul.u32 16, %s19
        $region70: #{gnn_encoder.3} parent=27 // pred_fallthru
          _
        // Predicated region
        $region71: #{gnn_encoder.3} parent=27 // pred_check
          %p287 = pneg %p119
        $region72: #{gnn_encoder.3} parent=27 // pred_check_branch
          %289 = sbr.rel (%p287) target = $region74
        $region73: #{gnn_encoder.3} parent=27 // pred_region
          %s290 = smul.u32 16, %s19
          %p291 = scmp.lt.s32.totalorder %s290, 47
          %s292 = scalar_select %p291, %s290, 47
          %s293 = smul.addr %s292, 4
          %s294 = scalar_lea.vmem %s3, %s293
          %s295 = smul.u32 16, %s19
        $region74: #{gnn_encoder.3} parent=27 // pred_fallthru
          _
      $region28: #{gnn_encoder.3} parent=5 // pred_fallthru
        _
      %p296 = scmp.le.s32.totalorder 1, %s12
      %p297 = scmp.lt.s32.totalorder %s12, 10
      %p298 = pnand %p296, %p297
      %p299 = pneg %p298
      // Predicated region
      $region75: #{gnn_encoder.3} parent=5 // pred_check
        _
      $region76: #{gnn_encoder.3} parent=5 // pred_check_branch
        %301 = sbr.rel (%p298) target = $region78
      $region77: #{gnn_encoder.3} parent=5 // pred_region
        %s302 = ssub.s32 %s12, 1
        %s303 = sand.u32 %s39, 1
        %s304 = sand.u32 %s39, 1
        %s305 = smul.addr %s304, 32
        %s306 = scalar_lea.vmem [#allocation3], %s305
        // Predicated region
        $region79: #{gnn_encoder.3} parent=77 // pred_check
          %p307 = pneg %p52
        $region80: #{gnn_encoder.3} parent=77 // pred_check_branch
          %309 = sbr.rel (%p307) target = $region82
        $region81: #{gnn_encoder.3} parent=77 // pred_region
          _
        $region82: #{gnn_encoder.3} parent=77 // pred_fallthru
          _
        %s310 = sand.u32 %s39, 1
        %s311 = sand.u32 %s39, 1
        %s312 = smul.addr %s311, 32
        %s313 = scalar_lea.vmem [#allocation3], %s312
        %p314 = pneg %p52
        %p315 = pneg %p49
        %s316 = smul.u32 16, %s21
        %p317 = scmp.lt.s32.totalorder %s316, 47
        %s318 = scalar_select %p317, %s316, 47
        %s319 = smul.addr %s318, 8
        %s320 = scalar_lea.vmem %s1, %s319
        %p321 = pneg %p78
        %p322 = pneg %p75
        %p323 = pneg %p99
        %p324 = pneg %p96
        %s325 = smul.u32 16, %s21
        %p326 = scmp.lt.s32.totalorder %s325, 47
        %s327 = scalar_select %p326, %s325, 47
        %s328 = smul.addr %s327, 4
        %s329 = scalar_lea.vmem %s3, %s328
        %p330 = pneg %p125
        %p331 = pneg %p122
        %p332 = pneg %p146
        %p333 = pneg %p143
        %p334 = pneg %p167
        %p335 = pneg %p164
        %p336 = pneg %p193
        %p337 = pneg %p190
        %s338 = smul.u32 16, %s21
        %p339 = scmp.lt.s32.totalorder %s338, 47
        %s340 = scalar_select %p339, %s338, 47
        %s341 = smul.addr %s340, 8
        %s342 = scalar_lea.vmem %s6, %s341
        %s343 = smul.u32 4, %s21
        %s344 = smul.u32 16, %s21
        %p345 = scmp.lt.s32.totalorder %s344, 47
        %s346 = scalar_select %p345, %s344, 47
        %s347 = smul.addr %s346, 8
        %s348 = scalar_lea.vmem %s1, %s347
        %s349 = smul.u32 16, %s21
        %s350 = smul.u32 16, %s21
        %p351 = scmp.lt.s32.totalorder %s350, 47
        %s352 = scalar_select %p351, %s350, 47
        %s353 = smul.addr %s352, 4
        %s354 = scalar_lea.vmem %s3, %s353
        %s355 = smul.u32 16, %s21
        %s356 = smul.u32 16, %s21
        %p357 = scmp.lt.s32.totalorder %s356, 47
        %s358 = scalar_select %p357, %s356, 47
        %s359 = smul.addr %s358, 8
        %s360 = scalar_lea.vmem %s6, %s359
        %s361 = smul.u32 16, %s21
        %p362 = scmp.eq.s32.totalorder %s22, 0
        // Predicated region
        $region83: #{gnn_encoder.3} parent=77 // pred_check
          %p363 = pneg %p362
        $region84: #{gnn_encoder.3} parent=77 // pred_check_branch
          %365 = sbr.rel (%p363) target = $region86
        $region85: #{gnn_encoder.3} parent=77 // pred_region
          %366 = vst [vmem:[#allocation2] sm:$0xff] 0.0
          %367 = vst [vmem:[#allocation2 + $0x8] sm:$0xff] 0.0
          %368 = vst [vmem:[#allocation2 + $0x10] sm:$0xff] 0.0
          %369 = vst [vmem:[#allocation2 + $0x18] sm:$0xff] 0.0
          %370 = vst [vmem:[#allocation2 + $0x20] sm:$0xff] 0.0
          %371 = vst [vmem:[#allocation2 + $0x28] sm:$0xff] 0.0
          %372 = vst [vmem:[#allocation2 + $0x30] sm:$0xff] 0.0
          %373 = vst [vmem:[#allocation2 + $0x38] sm:$0xff] 0.0
          %374 = vst [vmem:[#allocation2 + $0x40] sm:$0xff] 0.0
          %375 = vst [vmem:[#allocation2 + $0x48] sm:$0xff] 0.0
          %376 = vst [vmem:[#allocation2 + $0x50] sm:$0xff] 0.0
          %377 = vst [vmem:[#allocation2 + $0x58] sm:$0xff] 0.0
          %378 = vst [vmem:[#allocation2 + $0x60] sm:$0xff] 0.0
          %379 = vst [vmem:[#allocation2 + $0x68] sm:$0xff] 0.0
          %380 = vst [vmem:[#allocation2 + $0x70] sm:$0xff] 0.0
          %381 = vst [vmem:[#allocation2 + $0x78] sm:$0xff] 0.0
        $region86: #{gnn_encoder.3} parent=77 // pred_fallthru
          _
        %v382 = vld [vmem:[%s306] sm:$0xff]
        %v383 = vld [vmem:[%s306 + $0x8] sm:$0xff]
        %v384 = vld [vmem:[%s306 + $0x10] sm:$0xff]
        %v385 = vld [vmem:[%s306 + $0x18] sm:$0xff]
        %v386 = vunpack.c.0.s8 %v382
        %v387 = vunpack.c.1.s8 %v382
        %v388 = vunpack.c.2.s8 %v382
        %v389 = vunpack.c.3.s8 %v382
        %v390 = vunpack.c.0.s8 %v383
        %v391 = vunpack.c.1.s8 %v383
        %v392 = vunpack.c.2.s8 %v383
        %v393 = vunpack.c.3.s8 %v383
        %v394 = vunpack.c.0.s8 %v384
        %v395 = vunpack.c.1.s8 %v384
        %v396 = vunpack.c.2.s8 %v384
        %v397 = vunpack.c.3.s8 %v384
        %v398 = vunpack.c.0.s8 %v385
        %v399 = vunpack.c.1.s8 %v385
        %v400 = vunpack.c.2.s8 %v385
        %v401 = vunpack.c.3.s8 %v385
        %v402 = vcvt.s32.f32 %v386
        %v403 = vcvt.s32.f32 %v387
        %v404 = vcvt.s32.f32 %v388
        %v405 = vcvt.s32.f32 %v389
        %v406 = vcvt.s32.f32 %v390
        %v407 = vcvt.s32.f32 %v391
        %v408 = vcvt.s32.f32 %v392
        %v409 = vcvt.s32.f32 %v393
        %v410 = vcvt.s32.f32 %v394
        %v411 = vcvt.s32.f32 %v395
        %v412 = vcvt.s32.f32 %v396
        %v413 = vcvt.s32.f32 %v397
        %v414 = vcvt.s32.f32 %v398
        %v415 = vcvt.s32.f32 %v399
        %v416 = vcvt.s32.f32 %v400
        %v417 = vcvt.s32.f32 %v401
        %v418 = vpack.c.bf16 %v403, %v402
        %v419 = vpack.c.bf16 %v405, %v404
        %v420 = vpack.c.bf16 %v407, %v406
        %v421 = vpack.c.bf16 %v409, %v408
        %v422 = vpack.c.bf16 %v411, %v410
        %v423 = vpack.c.bf16 %v413, %v412
        %v424 = vpack.c.bf16 %v415, %v414
        %v425 = vpack.c.bf16 %v417, %v416
        %s426 = smul.u32 %s22, 128
        %s427 = sshra.s32 %s426, 3
        %s428 = sand.u32 %s426, 7
        %s429 = smul.addr %s427, 4
        %s430 = scalar_lea.vmem %s2, %s429
        %v431 = vld [vmem:[%s430] sm:$0xf]
        %v432 = vld [vmem:[%s430 + $0x4] sm:$0xf]
        %v433 = vld [vmem:[%s430 + $0x8] sm:$0xf]
        %v434 = vld [vmem:[%s430 + $0xc] sm:$0xf]
        %v435 = vld [vmem:[%s430 + $0x10] sm:$0xf]
        %v436 = vld [vmem:[%s430 + $0x14] sm:$0xf]
        %v437 = vld [vmem:[%s430 + $0x18] sm:$0xf]
        %v438 = vld [vmem:[%s430 + $0x1c] sm:$0xf]
        %v439 = vld [vmem:[%s430 + $0x20] sm:$0xf]
        %v440 = vld [vmem:[%s430 + $0x24] sm:$0xf]
        %v441 = vld [vmem:[%s430 + $0x28] sm:$0xf]
        %v442 = vld [vmem:[%s430 + $0x2c] sm:$0xf]
        %v443 = vld [vmem:[%s430 + $0x30] sm:$0xf]
        %v444 = vld [vmem:[%s430 + $0x34] sm:$0xf]
        %v445 = vld [vmem:[%s430 + $0x38] sm:$0xf]
        %v446 = vld [vmem:[%s430 + $0x3c] sm:$0xf]
        %v447 = vld [vmem:[#allocation2] sm:$0xff]
        %v448 = vld [vmem:[#allocation2 + $0x8] sm:$0xff]
        %v449 = vld [vmem:[#allocation2 + $0x10] sm:$0xff]
        %v450 = vld [vmem:[#allocation2 + $0x18] sm:$0xff]
        %v451 = vld [vmem:[#allocation2 + $0x20] sm:$0xff]
        %v452 = vld [vmem:[#allocation2 + $0x28] sm:$0xff]
        %v453 = vld [vmem:[#allocation2 + $0x30] sm:$0xff]
        %v454 = vld [vmem:[#allocation2 + $0x38] sm:$0xff]
        %v455 = vld [vmem:[#allocation2 + $0x40] sm:$0xff]
        %v456 = vld [vmem:[#allocation2 + $0x48] sm:$0xff]
        %v457 = vld [vmem:[#allocation2 + $0x50] sm:$0xff]
        %v458 = vld [vmem:[#allocation2 + $0x58] sm:$0xff]
        %v459 = vld [vmem:[#allocation2 + $0x60] sm:$0xff]
        %v460 = vld [vmem:[#allocation2 + $0x68] sm:$0xff]
        %v461 = vld [vmem:[#allocation2 + $0x70] sm:$0xff]
        %v462 = vld [vmem:[#allocation2 + $0x78] sm:$0xff]
        %v479 = vunpack.c.l.b16 %v431
        %v480 = vunpack.c.l.b16 %v432
        %v481 = vunpack.c.l.b16 %v433
        %v482 = vunpack.c.l.b16 %v434
        %v483 = vunpack.c.l.b16 %v435
        %v484 = vunpack.c.l.b16 %v436
        %v485 = vunpack.c.l.b16 %v437
        %v486 = vunpack.c.l.b16 %v438
        %v487 = vunpack.c.l.b16 %v439
        %v488 = vunpack.c.l.b16 %v440
        %v489 = vunpack.c.l.b16 %v441
        %v490 = vunpack.c.l.b16 %v442
        %v491 = vunpack.c.l.b16 %v443
        %v492 = vunpack.c.l.b16 %v444
        %v493 = vunpack.c.l.b16 %v445
        %v494 = vunpack.c.l.b16 %v446
        %v495 = vpack.c.b16 %v480, %v479
        %v496 = vpack.c.b16 %v482, %v481
        %v497 = vpack.c.b16 %v484, %v483
        %v498 = vpack.c.b16 %v486, %v485
        %v499 = vpack.c.b16 %v488, %v487
        %v500 = vpack.c.b16 %v490, %v489
        %v501 = vpack.c.b16 %v492, %v491
        %v502 = vpack.c.b16 %v494, %v493
        %511 = vmatpush.bf16.msra.mxu0 %v502
        %512 = vmatpush.bf16.msra.mxu0 %v501
        %513 = vmatpush.bf16.msra.mxu0 %v500
        %514 = vmatpush.bf16.msra.mxu0 %v499
        %515 = vmatpush.bf16.msra.mxu0 %v498
        %516 = vmatpush.bf16.msra.mxu0 %v497
        %517 = vmatpush.bf16.msra.mxu0 %v496
        %518 = vmatpush.bf16.msra.mxu0 %v495
        %519 = vmatmul.bf16.gmra.mxu0 %v418
        %v520 = vpop.f32.mrf.mxu0
        %v521 = vadd.f32 0.0, %v520
        %v522 = vpop.f32.mrf.mxu0
        %v523 = vadd.f32 0.0, %v522
        %524 = vmatmul.bf16.gmra.mxu0 %v419
        %v525 = vpop.f32.mrf.mxu0
        %v526 = vadd.f32 0.0, %v525
        %v527 = vpop.f32.mrf.mxu0
        %v528 = vadd.f32 0.0, %v527
        %529 = vmatmul.bf16.gmra.mxu0 %v420
        %v530 = vpop.f32.mrf.mxu0
        %v531 = vadd.f32 0.0, %v530
        %v532 = vpop.f32.mrf.mxu0
        %v533 = vadd.f32 0.0, %v532
        %534 = vmatmul.bf16.gmra.mxu0 %v421
        %v535 = vpop.f32.mrf.mxu0
        %v536 = vadd.f32 0.0, %v535
        %v537 = vpop.f32.mrf.mxu0
        %v538 = vadd.f32 0.0, %v537
        %539 = vmatmul.bf16.gmra.mxu0 %v422
        %v540 = vpop.f32.mrf.mxu0
        %v541 = vadd.f32 0.0, %v540
        %v542 = vpop.f32.mrf.mxu0
        %v543 = vadd.f32 0.0, %v542
        %544 = vmatmul.bf16.gmra.mxu0 %v423
        %v545 = vpop.f32.mrf.mxu0
        %v546 = vadd.f32 0.0, %v545
        %v547 = vpop.f32.mrf.mxu0
        %v548 = vadd.f32 0.0, %v547
        %549 = vmatmul.bf16.gmra.mxu0 %v424
        %v550 = vpop.f32.mrf.mxu0
        %v551 = vadd.f32 0.0, %v550
        %v552 = vpop.f32.mrf.mxu0
        %v553 = vadd.f32 0.0, %v552
        %554 = vmatmul.bf16.gmra.mxu0 %v425
        %v555 = vpop.f32.mrf.mxu0
        %v556 = vadd.f32 0.0, %v555
        %v557 = vpop.f32.mrf.mxu0
        %v558 = vadd.f32 0.0, %v557
        %559 = vdwg.mxu0
        %v560 = vadd.f32 %v447, %v521
        %v561 = vadd.f32 %v448, %v523
        %v562 = vadd.f32 %v449, %v526
        %v563 = vadd.f32 %v450, %v528
        %v564 = vadd.f32 %v451, %v531
        %v565 = vadd.f32 %v452, %v533
        %v566 = vadd.f32 %v453, %v536
        %v567 = vadd.f32 %v454, %v538
        %v568 = vadd.f32 %v455, %v541
        %v569 = vadd.f32 %v456, %v543
        %v570 = vadd.f32 %v457, %v546
        %v571 = vadd.f32 %v458, %v548
        %v572 = vadd.f32 %v459, %v551
        %v573 = vadd.f32 %v460, %v553
        %v574 = vadd.f32 %v461, %v556
        %v575 = vadd.f32 %v462, %v558
        %576 = vst [vmem:[#allocation2] sm:$0xff] %v560
        %577 = vst [vmem:[#allocation2 + $0x8] sm:$0xff] %v561
        %578 = vst [vmem:[#allocation2 + $0x10] sm:$0xff] %v562
        %579 = vst [vmem:[#allocation2 + $0x18] sm:$0xff] %v563
        %580 = vst [vmem:[#allocation2 + $0x20] sm:$0xff] %v564
        %581 = vst [vmem:[#allocation2 + $0x28] sm:$0xff] %v565
        %582 = vst [vmem:[#allocation2 + $0x30] sm:$0xff] %v566
        %583 = vst [vmem:[#allocation2 + $0x38] sm:$0xff] %v567
        %584 = vst [vmem:[#allocation2 + $0x40] sm:$0xff] %v568
        %585 = vst [vmem:[#allocation2 + $0x48] sm:$0xff] %v569
        %586 = vst [vmem:[#allocation2 + $0x50] sm:$0xff] %v570
        %587 = vst [vmem:[#allocation2 + $0x58] sm:$0xff] %v571
        %588 = vst [vmem:[#allocation2 + $0x60] sm:$0xff] %v572
        %589 = vst [vmem:[#allocation2 + $0x68] sm:$0xff] %v573
        %590 = vst [vmem:[#allocation2 + $0x70] sm:$0xff] %v574
        %591 = vst [vmem:[#allocation2 + $0x78] sm:$0xff] %v575
        %p592 = scmp.eq.s32.totalorder %s22, 2
        // Predicated region
        $region87: #{gnn_encoder.3} parent=77 // pred_check
          %p593 = pneg %p592
        $region88: #{gnn_encoder.3} parent=77 // pred_check_branch
          %595 = sbr.rel (%p593) target = $region90
        $region89: #{gnn_encoder.3} parent=77 // pred_region
          %v596 = vld [vmem:[#allocation2] sm:$0xff]
          %v597 = vld [vmem:[#allocation2 + $0x8] sm:$0xff]
          %v598 = vld [vmem:[#allocation2 + $0x10] sm:$0xff]
          %v599 = vld [vmem:[#allocation2 + $0x18] sm:$0xff]
          %v600 = vld [vmem:[#allocation2 + $0x20] sm:$0xff]
          %v601 = vld [vmem:[#allocation2 + $0x28] sm:$0xff]
          %v602 = vld [vmem:[#allocation2 + $0x30] sm:$0xff]
          %v603 = vld [vmem:[#allocation2 + $0x38] sm:$0xff]
          %v604 = vld [vmem:[#allocation2 + $0x40] sm:$0xff]
          %v605 = vld [vmem:[#allocation2 + $0x48] sm:$0xff]
          %v606 = vld [vmem:[#allocation2 + $0x50] sm:$0xff]
          %v607 = vld [vmem:[#allocation2 + $0x58] sm:$0xff]
          %v608 = vld [vmem:[#allocation2 + $0x60] sm:$0xff]
          %v609 = vld [vmem:[#allocation2 + $0x68] sm:$0xff]
          %v610 = vld [vmem:[#allocation2 + $0x70] sm:$0xff]
          %v611 = vld [vmem:[#allocation2 + $0x78] sm:$0xff]
          %v612 = vld [vmem:[%s348] sm:$0xff]
          %v613 = vld [vmem:[%s348 + $0x8] sm:$0xff]
          %v614 = vld [vmem:[%s348 + $0x10] sm:$0xff]
          %v615 = vld [vmem:[%s348 + $0x18] sm:$0xff]
          %v616 = vld [vmem:[%s348 + $0x20] sm:$0xff]
          %v617 = vld [vmem:[%s348 + $0x28] sm:$0xff]
          %v618 = vld [vmem:[%s348 + $0x30] sm:$0xff]
          %v619 = vld [vmem:[%s348 + $0x38] sm:$0xff]
          %v620 = vld [vmem:[%s348 + $0x40] sm:$0xff]
          %v621 = vld [vmem:[%s348 + $0x48] sm:$0xff]
          %v622 = vld [vmem:[%s348 + $0x50] sm:$0xff]
          %v623 = vld [vmem:[%s348 + $0x58] sm:$0xff]
          %v624 = vld [vmem:[%s348 + $0x60] sm:$0xff]
          %v625 = vld [vmem:[%s348 + $0x68] sm:$0xff]
          %v626 = vld [vmem:[%s348 + $0x70] sm:$0xff]
          %v627 = vld [vmem:[%s348 + $0x78] sm:$0xff]
          %629 = vset.pattern.permute.xlu0 0
          %630 = vperm.xlu0 %629, %v612
          %v631 = vpop.permute.xlu0 %630
          %634 = vset.pattern.permute.xlu0 0
          %635 = vperm.xlu0 %634, %v613
          %v636 = vpop.permute.xlu0 %635
          %639 = vset.pattern.permute.xlu0 0
          %640 = vperm.xlu0 %639, %v614
          %v641 = vpop.permute.xlu0 %640
          %644 = vset.pattern.permute.xlu0 0
          %645 = vperm.xlu0 %644, %v615
          %v646 = vpop.permute.xlu0 %645
          %649 = vset.pattern.permute.xlu0 0
          %650 = vperm.xlu0 %649, %v616
          %v651 = vpop.permute.xlu0 %650
          %654 = vset.pattern.permute.xlu0 0
          %655 = vperm.xlu0 %654, %v617
          %v656 = vpop.permute.xlu0 %655
          %659 = vset.pattern.permute.xlu0 0
          %660 = vperm.xlu0 %659, %v618
          %v661 = vpop.permute.xlu0 %660
          %664 = vset.pattern.permute.xlu0 0
          %665 = vperm.xlu0 %664, %v619
          %v666 = vpop.permute.xlu0 %665
          %669 = vset.pattern.permute.xlu0 0
          %670 = vperm.xlu0 %669, %v620
          %v671 = vpop.permute.xlu0 %670
          %674 = vset.pattern.permute.xlu0 0
          %675 = vperm.xlu0 %674, %v621
          %v676 = vpop.permute.xlu0 %675
          %679 = vset.pattern.permute.xlu0 0
          %680 = vperm.xlu0 %679, %v622
          %v681 = vpop.permute.xlu0 %680
          %684 = vset.pattern.permute.xlu0 0
          %685 = vperm.xlu0 %684, %v623
          %v686 = vpop.permute.xlu0 %685
          %689 = vset.pattern.permute.xlu0 0
          %690 = vperm.xlu0 %689, %v624
          %v691 = vpop.permute.xlu0 %690
          %694 = vset.pattern.permute.xlu0 0
          %695 = vperm.xlu0 %694, %v625
          %v696 = vpop.permute.xlu0 %695
          %699 = vset.pattern.permute.xlu0 0
          %700 = vperm.xlu0 %699, %v626
          %v701 = vpop.permute.xlu0 %700
          %704 = vset.pattern.permute.xlu0 0
          %705 = vperm.xlu0 %704, %v627
          %v706 = vpop.permute.xlu0 %705
          %v708 = vmul.f32 %v596, %v631
          %v709 = vmul.f32 %v597, %v636
          %v710 = vmul.f32 %v598, %v641
          %v711 = vmul.f32 %v599, %v646
          %v712 = vmul.f32 %v600, %v651
          %v713 = vmul.f32 %v601, %v656
          %v714 = vmul.f32 %v602, %v661
          %v715 = vmul.f32 %v603, %v666
          %v716 = vmul.f32 %v604, %v671
          %v717 = vmul.f32 %v605, %v676
          %v718 = vmul.f32 %v606, %v681
          %v719 = vmul.f32 %v607, %v686
          %v720 = vmul.f32 %v608, %v691
          %v721 = vmul.f32 %v609, %v696
          %v722 = vmul.f32 %v610, %v701
          %v723 = vmul.f32 %v611, %v706
          %v724 = vpack.c.bf16 %v708, %v708
          %v725 = vpack.c.bf16 %v709, %v709
          %v726 = vpack.c.bf16 %v710, %v710
          %v727 = vpack.c.bf16 %v711, %v711
          %v728 = vpack.c.bf16 %v712, %v712
          %v729 = vpack.c.bf16 %v713, %v713
          %v730 = vpack.c.bf16 %v714, %v714
          %v731 = vpack.c.bf16 %v715, %v715
          %v732 = vpack.c.bf16 %v716, %v716
          %v733 = vpack.c.bf16 %v717, %v717
          %v734 = vpack.c.bf16 %v718, %v718
          %v735 = vpack.c.bf16 %v719, %v719
          %v736 = vpack.c.bf16 %v720, %v720
          %v737 = vpack.c.bf16 %v721, %v721
          %v738 = vpack.c.bf16 %v722, %v722
          %v739 = vpack.c.bf16 %v723, %v723
          %v740 = vld [vmem:[%s354] sm:$0xf]
          %v741 = vld [vmem:[%s354 + $0x4] sm:$0xf]
          %v742 = vld [vmem:[%s354 + $0x8] sm:$0xf]
          %v743 = vld [vmem:[%s354 + $0xc] sm:$0xf]
          %v744 = vld [vmem:[%s354 + $0x10] sm:$0xf]
          %v745 = vld [vmem:[%s354 + $0x14] sm:$0xf]
          %v746 = vld [vmem:[%s354 + $0x18] sm:$0xf]
          %v747 = vld [vmem:[%s354 + $0x1c] sm:$0xf]
          %v748 = vld [vmem:[%s354 + $0x20] sm:$0xf]
          %v749 = vld [vmem:[%s354 + $0x24] sm:$0xf]
          %v750 = vld [vmem:[%s354 + $0x28] sm:$0xf]
          %v751 = vld [vmem:[%s354 + $0x2c] sm:$0xf]
          %v752 = vld [vmem:[%s354 + $0x30] sm:$0xf]
          %v753 = vld [vmem:[%s354 + $0x34] sm:$0xf]
          %v754 = vld [vmem:[%s354 + $0x38] sm:$0xf]
          %v755 = vld [vmem:[%s354 + $0x3c] sm:$0xf]
          %v772 = vunpack.c.l.b16 %v724
          %v773 = vunpack.c.l.b16 %v725
          %v774 = vunpack.c.l.b16 %v726
          %v775 = vunpack.c.l.b16 %v727
          %v776 = vunpack.c.l.b16 %v728
          %v777 = vunpack.c.l.b16 %v729
          %v778 = vunpack.c.l.b16 %v730
          %v779 = vunpack.c.l.b16 %v731
          %v780 = vunpack.c.l.b16 %v732
          %v781 = vunpack.c.l.b16 %v733
          %v782 = vunpack.c.l.b16 %v734
          %v783 = vunpack.c.l.b16 %v735
          %v784 = vunpack.c.l.b16 %v736
          %v785 = vunpack.c.l.b16 %v737
          %v786 = vunpack.c.l.b16 %v738
          %v787 = vunpack.c.l.b16 %v739
          %v788 = vpack.c.b16 %v773, %v772
          %v789 = vpack.c.b16 %v775, %v774
          %v790 = vpack.c.b16 %v777, %v776
          %v791 = vpack.c.b16 %v779, %v778
          %v792 = vpack.c.b16 %v781, %v780
          %v793 = vpack.c.b16 %v783, %v782
          %v794 = vpack.c.b16 %v785, %v784
          %v795 = vpack.c.b16 %v787, %v786
          %v820 = vunpack.c.l.b16 %v740
          %v821 = vunpack.c.l.b16 %v741
          %v822 = vunpack.c.l.b16 %v742
          %v823 = vunpack.c.l.b16 %v743
          %v824 = vunpack.c.l.b16 %v744
          %v825 = vunpack.c.l.b16 %v745
          %v826 = vunpack.c.l.b16 %v746
          %v827 = vunpack.c.l.b16 %v747
          %v828 = vunpack.c.l.b16 %v748
          %v829 = vunpack.c.l.b16 %v749
          %v830 = vunpack.c.l.b16 %v750
          %v831 = vunpack.c.l.b16 %v751
          %v832 = vunpack.c.l.b16 %v752
          %v833 = vunpack.c.l.b16 %v753
          %v834 = vunpack.c.l.b16 %v754
          %v835 = vunpack.c.l.b16 %v755
          %v836 = vpack.c.b16 %v821, %v820
          %v837 = vpack.c.b16 %v823, %v822
          %v838 = vpack.c.b16 %v825, %v824
          %v839 = vpack.c.b16 %v827, %v826
          %v840 = vpack.c.b16 %v829, %v828
          %v841 = vpack.c.b16 %v831, %v830
          %v842 = vpack.c.b16 %v833, %v832
          %v843 = vpack.c.b16 %v835, %v834
          %v852 = vld [vmem:[%s4] sm:$0xf]
          %v853 = vld [vmem:[%s4 + $0x4] sm:$0xf]
          %v854 = vld [vmem:[%s4 + $0x8] sm:$0xf]
          %v855 = vld [vmem:[%s4 + $0xc] sm:$0xf]
          %v856 = vld [vmem:[%s4 + $0x10] sm:$0xf]
          %v857 = vld [vmem:[%s4 + $0x14] sm:$0xf]
          %v858 = vld [vmem:[%s4 + $0x18] sm:$0xf]
          %v859 = vld [vmem:[%s4 + $0x1c] sm:$0xf]
          %v860 = vld [vmem:[%s4 + $0x20] sm:$0xf]
          %v861 = vld [vmem:[%s4 + $0x24] sm:$0xf]
          %v862 = vld [vmem:[%s4 + $0x28] sm:$0xf]
          %v863 = vld [vmem:[%s4 + $0x2c] sm:$0xf]
          %v864 = vld [vmem:[%s4 + $0x30] sm:$0xf]
          %v865 = vld [vmem:[%s4 + $0x34] sm:$0xf]
          %v866 = vld [vmem:[%s4 + $0x38] sm:$0xf]
          %v867 = vld [vmem:[%s4 + $0x3c] sm:$0xf]
          %v868 = vld [vmem:[%s4 + $0x40] sm:$0xf]
          %v869 = vld [vmem:[%s4 + $0x44] sm:$0xf]
          %v870 = vld [vmem:[%s4 + $0x48] sm:$0xf]
          %v871 = vld [vmem:[%s4 + $0x4c] sm:$0xf]
          %v872 = vld [vmem:[%s4 + $0x50] sm:$0xf]
          %v873 = vld [vmem:[%s4 + $0x54] sm:$0xf]
          %v874 = vld [vmem:[%s4 + $0x58] sm:$0xf]
          %v875 = vld [vmem:[%s4 + $0x5c] sm:$0xf]
          %v876 = vld [vmem:[%s4 + $0x60] sm:$0xf]
          %v877 = vld [vmem:[%s4 + $0x64] sm:$0xf]
          %v878 = vld [vmem:[%s4 + $0x68] sm:$0xf]
          %v879 = vld [vmem:[%s4 + $0x6c] sm:$0xf]
          %v880 = vld [vmem:[%s4 + $0x70] sm:$0xf]
          %v881 = vld [vmem:[%s4 + $0x74] sm:$0xf]
          %v882 = vld [vmem:[%s4 + $0x78] sm:$0xf]
          %v883 = vld [vmem:[%s4 + $0x7c] sm:$0xf]
          %v884 = vld [vmem:[%s5] sm:$0x1]
          %v886 = vperm.slane %v884, 0
          %v920 = vunpack.c.l.b16 %v852
          %v921 = vunpack.c.l.b16 %v853
          %v922 = vunpack.c.l.b16 %v854
          %v923 = vunpack.c.l.b16 %v855
          %v924 = vunpack.c.l.b16 %v856
          %v925 = vunpack.c.l.b16 %v857
          %v926 = vunpack.c.l.b16 %v858
          %v927 = vunpack.c.l.b16 %v859
          %v928 = vunpack.c.l.b16 %v860
          %v929 = vunpack.c.l.b16 %v861
          %v930 = vunpack.c.l.b16 %v862
          %v931 = vunpack.c.l.b16 %v863
          %v932 = vunpack.c.l.b16 %v864
          %v933 = vunpack.c.l.b16 %v865
          %v934 = vunpack.c.l.b16 %v866
          %v935 = vunpack.c.l.b16 %v867
          %v936 = vunpack.c.l.b16 %v868
          %v937 = vunpack.c.l.b16 %v869
          %v938 = vunpack.c.l.b16 %v870
          %v939 = vunpack.c.l.b16 %v871
          %v940 = vunpack.c.l.b16 %v872
          %v941 = vunpack.c.l.b16 %v873
          %v942 = vunpack.c.l.b16 %v874
          %v943 = vunpack.c.l.b16 %v875
          %v944 = vunpack.c.l.b16 %v876
          %v945 = vunpack.c.l.b16 %v877
          %v946 = vunpack.c.l.b16 %v878
          %v947 = vunpack.c.l.b16 %v879
          %v948 = vunpack.c.l.b16 %v880
          %v949 = vunpack.c.l.b16 %v881
          %v950 = vunpack.c.l.b16 %v882
          %v951 = vunpack.c.l.b16 %v883
          %v952 = vpack.c.b16 %v921, %v920
          %v953 = vpack.c.b16 %v923, %v922
          %v954 = vpack.c.b16 %v925, %v924
          %v955 = vpack.c.b16 %v927, %v926
          %v956 = vpack.c.b16 %v929, %v928
          %v957 = vpack.c.b16 %v931, %v930
          %v958 = vpack.c.b16 %v933, %v932
          %v959 = vpack.c.b16 %v935, %v934
          %v960 = vpack.c.b16 %v937, %v936
          %v961 = vpack.c.b16 %v939, %v938
          %v962 = vpack.c.b16 %v941, %v940
          %v963 = vpack.c.b16 %v943, %v942
          %v964 = vpack.c.b16 %v945, %v944
          %v965 = vpack.c.b16 %v947, %v946
          %v966 = vpack.c.b16 %v949, %v948
          %v967 = vpack.c.b16 %v951, %v950
          %984 = vmatpush.bf16.msra.mxu0 %v959
          %985 = vmatpush.bf16.msra.mxu0 %v958
          %986 = vmatpush.bf16.msra.mxu0 %v957
          %987 = vmatpush.bf16.msra.mxu0 %v956
          %988 = vmatpush.bf16.msra.mxu0 %v955
          %989 = vmatpush.bf16.msra.mxu0 %v954
          %990 = vmatpush.bf16.msra.mxu0 %v953
          %991 = vmatpush.bf16.msra.mxu0 %v952
          %992 = vmatmul.bf16.gmra.mxu0 %v788
          %v993 = vpop.f32.mrf.mxu0
          %v994 = vadd.f32 %v886, %v993
          %v995 = vpop.f32.mrf.mxu0
          %v996 = vadd.f32 %v886, %v995
          %997 = vmatmul.bf16.gmra.mxu0 %v789
          %v998 = vpop.f32.mrf.mxu0
          %v999 = vadd.f32 %v886, %v998
          %v1000 = vpop.f32.mrf.mxu0
          %v1001 = vadd.f32 %v886, %v1000
          %1002 = vmatmul.bf16.gmra.mxu0 %v790
          %v1003 = vpop.f32.mrf.mxu0
          %v1004 = vadd.f32 %v886, %v1003
          %v1005 = vpop.f32.mrf.mxu0
          %v1006 = vadd.f32 %v886, %v1005
          %1007 = vmatmul.bf16.gmra.mxu0 %v791
          %v1008 = vpop.f32.mrf.mxu0
          %v1009 = vadd.f32 %v886, %v1008
          %v1010 = vpop.f32.mrf.mxu0
          %v1011 = vadd.f32 %v886, %v1010
          %1012 = vmatmul.bf16.gmra.mxu0 %v792
          %v1013 = vpop.f32.mrf.mxu0
          %v1014 = vadd.f32 %v886, %v1013
          %v1015 = vpop.f32.mrf.mxu0
          %v1016 = vadd.f32 %v886, %v1015
          %1017 = vmatmul.bf16.gmra.mxu0 %v793
          %v1018 = vpop.f32.mrf.mxu0
          %v1019 = vadd.f32 %v886, %v1018
          %v1020 = vpop.f32.mrf.mxu0
          %v1021 = vadd.f32 %v886, %v1020
          %1022 = vmatmul.bf16.gmra.mxu0 %v794
          %v1023 = vpop.f32.mrf.mxu0
          %v1024 = vadd.f32 %v886, %v1023
          %v1025 = vpop.f32.mrf.mxu0
          %v1026 = vadd.f32 %v886, %v1025
          %1027 = vmatmul.bf16.gmra.mxu0 %v795
          %v1028 = vpop.f32.mrf.mxu0
          %v1029 = vadd.f32 %v886, %v1028
          %v1030 = vpop.f32.mrf.mxu0
          %v1031 = vadd.f32 %v886, %v1030
          %1032 = vdwg.mxu0
          %1033 = vmatpush.bf16.msra.mxu0 %v967
          %1034 = vmatpush.bf16.msra.mxu0 %v966
          %1035 = vmatpush.bf16.msra.mxu0 %v965
          %1036 = vmatpush.bf16.msra.mxu0 %v964
          %1037 = vmatpush.bf16.msra.mxu0 %v963
          %1038 = vmatpush.bf16.msra.mxu0 %v962
          %1039 = vmatpush.bf16.msra.mxu0 %v961
          %1040 = vmatpush.bf16.msra.mxu0 %v960
          %1041 = vmatmul.bf16.gmra.mxu0 %v836
          %v1042 = vpop.f32.mrf.mxu0
          %v1043 = vadd.f32 %v994, %v1042
          %v1044 = vpop.f32.mrf.mxu0
          %v1045 = vadd.f32 %v996, %v1044
          %1046 = vmatmul.bf16.gmra.mxu0 %v837
          %v1047 = vpop.f32.mrf.mxu0
          %v1048 = vadd.f32 %v999, %v1047
          %v1049 = vpop.f32.mrf.mxu0
          %v1050 = vadd.f32 %v1001, %v1049
          %1051 = vmatmul.bf16.gmra.mxu0 %v838
          %v1052 = vpop.f32.mrf.mxu0
          %v1053 = vadd.f32 %v1004, %v1052
          %v1054 = vpop.f32.mrf.mxu0
          %v1055 = vadd.f32 %v1006, %v1054
          %1056 = vmatmul.bf16.gmra.mxu0 %v839
          %v1057 = vpop.f32.mrf.mxu0
          %v1058 = vadd.f32 %v1009, %v1057
          %v1059 = vpop.f32.mrf.mxu0
          %v1060 = vadd.f32 %v1011, %v1059
          %1061 = vmatmul.bf16.gmra.mxu0 %v840
          %v1062 = vpop.f32.mrf.mxu0
          %v1063 = vadd.f32 %v1014, %v1062
          %v1064 = vpop.f32.mrf.mxu0
          %v1065 = vadd.f32 %v1016, %v1064
          %1066 = vmatmul.bf16.gmra.mxu0 %v841
          %v1067 = vpop.f32.mrf.mxu0
          %v1068 = vadd.f32 %v1019, %v1067
          %v1069 = vpop.f32.mrf.mxu0
          %v1070 = vadd.f32 %v1021, %v1069
          %1071 = vmatmul.bf16.gmra.mxu0 %v842
          %v1072 = vpop.f32.mrf.mxu0
          %v1073 = vadd.f32 %v1024, %v1072
          %v1074 = vpop.f32.mrf.mxu0
          %v1075 = vadd.f32 %v1026, %v1074
          %1076 = vmatmul.bf16.gmra.mxu0 %v843
          %v1077 = vpop.f32.mrf.mxu0
          %v1078 = vadd.f32 %v1029, %v1077
          %v1079 = vpop.f32.mrf.mxu0
          %v1080 = vadd.f32 %v1031, %v1079
          %1081 = vdwg.mxu0
          %1082 = vst [vmem:[%s360] sm:$0xff] %v1043
          %1083 = vst [vmem:[%s360 + $0x8] sm:$0xff] %v1045
          %1084 = vst [vmem:[%s360 + $0x10] sm:$0xff] %v1048
          %1085 = vst [vmem:[%s360 + $0x18] sm:$0xff] %v1050
          %1086 = vst [vmem:[%s360 + $0x20] sm:$0xff] %v1053
          %1087 = vst [vmem:[%s360 + $0x28] sm:$0xff] %v1055
          %1088 = vst [vmem:[%s360 + $0x30] sm:$0xff] %v1058
          %1089 = vst [vmem:[%s360 + $0x38] sm:$0xff] %v1060
          %1090 = vst [vmem:[%s360 + $0x40] sm:$0xff] %v1063
          %1091 = vst [vmem:[%s360 + $0x48] sm:$0xff] %v1065
          %1092 = vst [vmem:[%s360 + $0x50] sm:$0xff] %v1068
          %1093 = vst [vmem:[%s360 + $0x58] sm:$0xff] %v1070
          %1094 = vst [vmem:[%s360 + $0x60] sm:$0xff] %v1073
          %1095 = vst [vmem:[%s360 + $0x68] sm:$0xff] %v1075
          %1096 = vst [vmem:[%s360 + $0x70] sm:$0xff] %v1078
          %1097 = vst [vmem:[%s360 + $0x78] sm:$0xff] %v1080
        $region90: #{gnn_encoder.3} parent=77 // pred_fallthru
          _
        %s1098 = smul.u32 16, %s21
        %p1099 = scmp.lt.s32.totalorder %s1098, 47
        %s1100 = scalar_select %p1099, %s1098, 47
        %s1101 = smul.addr %s1100, 8
        %s1102 = scalar_lea.vmem %s6, %s1101
        // Predicated region
        $region91: #{gnn_encoder.3} parent=77 // pred_check
          %p1103 = pneg %p190
        $region92: #{gnn_encoder.3} parent=77 // pred_check_branch
          %1105 = sbr.rel (%p1103) target = $region94
        $region93: #{gnn_encoder.3} parent=77 // pred_region
          %s1106 = smul.u32 16, %s21
        $region94: #{gnn_encoder.3} parent=77 // pred_fallthru
          _
      $region78: #{gnn_encoder.3} parent=5 // pred_fallthru
        _
      %p1107 = scmp.le.s32.totalorder 2, %s12
      // Predicated region
      $region95: #{gnn_encoder.3} parent=5 // pred_check
        %p1108 = pneg %p1107
      $region96: #{gnn_encoder.3} parent=5 // pred_check_branch
        %1110 = sbr.rel (%p1108) target = $region98
      $region97: #{gnn_encoder.3} parent=5 // pred_region
        %s1111 = ssub.s32 %s12, 2
        // Predicated region
        $region99: #{gnn_encoder.3} parent=97 // pred_check
          %p1112 = pneg %p196
        $region100: #{gnn_encoder.3} parent=97 // pred_check_branch
          %1114 = sbr.rel (%p1112) target = $region102
        $region101: #{gnn_encoder.3} parent=97 // pred_region
          %s1115 = smul.u32 16, %s23
          %p1116 = scmp.lt.s32.totalorder %s1115, 47
          %s1117 = scalar_select %p1116, %s1115, 47
          %s1118 = smul.addr %s1117, 8
          %s1119 = scalar_lea.vmem %s6, %s1118
        $region102: #{gnn_encoder.3} parent=97 // pred_fallthru
          _
      $region98: #{gnn_encoder.3} parent=5 // pred_fallthru
        _
    $region6: #{gnn_encoder.3} parent=1 // loop_footer
      %s16 = sadd.s32 1, %s12
    $region7: #{gnn_encoder.3} parent=1 // loop_footer_branch
      %11 = sbr.rel target = $region3
    $region8: #{gnn_encoder.3} parent=1 // loop_exit
      _

</llo_original>
